<compile_context>
chip_gen: v5e
topology: v5e:2x2
jax: 0.10.0
libtpu: 0.0.40
codegen_flags: <defaults>
</compile_context>

<pallas_src>
import functools

import jax
import jax.numpy as jnp
from jax.experimental import pallas as pl
from jax.experimental.pallas import tpu as pltpu


# Hidden layer widths from the PyTorch module.
HIDDEN = (512, 256, 128, 64, 32)
OUT_DIM = 1
NEG_SLOPE = 0.2
BN_EPS = 1e-5


def _round_up(n, m):
    return ((n + m - 1) // m) * m


def _leaky_relu(y):
    # max(y, a*y) == LeakyReLU_a(y) for 0 < a < 1: vmul + vmax (2 VALU ops)
    # instead of vcmp + vmul + vsel for the where-form.
    return jnp.maximum(y, NEG_SLOPE * y)


def _mlp_kernel(*refs):
    """Fused MLP over one (TM, F) batch tile.

    Ref order:
      x_ref (TM, F),
      (w, b) x 5 hidden layers        # BN(eval) affine pre-folded into w / b
      w_out_row (1, 32), b_out (1, 1),
      o_ref (TM, 1)
    """
    x_ref = refs[0]
    o_ref = refs[-1]
    param_refs = refs[1:-1]

    # Keep activations f32 between layers (v5e VPU has no bf16 VALU ops);
    # cast to the weight dtype only at each dot input; accumulate f32 on MXU.
    h = x_ref[...].astype(jnp.float32)

    # 5 hidden blocks: Linear (BN-eval folded in) -> LeakyReLU(0.2).
    idx = 0
    for _ in range(len(HIDDEN)):
        w_ref, b_ref = param_refs[idx], param_refs[idx + 1]
        idx += 2
        y = jnp.dot(h.astype(w_ref.dtype), w_ref[...],
                    preferred_element_type=jnp.float32)
        h = _leaky_relu(y + b_ref[...])

    # Final Linear(32, 1): an N=1 matmul wastes the MXU (1 output lane, full
    # push + drain cost), so use a VPU multiply + lane reduce instead.
    w_row, b_out = param_refs[idx], param_refs[idx + 1]
    out = jnp.sum(h * w_row[...], axis=-1, keepdims=True) + b_out[...]
    o_ref[...] = out.astype(o_ref.dtype)


def make_params(input_features, key):
    """Deterministic synthetic parameters matching the PyTorch module shapes."""
    dims = (input_features,) + HIDDEN + (OUT_DIM,)
    params = []
    for li in range(len(dims) - 1):
        fan_in, fan_out = dims[li], dims[li + 1]
        key, kw, kb, kg, kbe, km, kv = jax.random.split(key, 7)
        w = (jax.random.normal(kw, (fan_in, fan_out), jnp.float32)
             * (1.0 / jnp.sqrt(fan_in)))
        b = jax.random.normal(kb, (fan_out,), jnp.float32) * 0.01
        layer = {"w": w, "b": b}
        if li < len(HIDDEN):  # hidden layers carry a BatchNorm1d
            gamma = 1.0 + 0.1 * jax.random.normal(kg, (fan_out,), jnp.float32)
            beta = 0.1 * jax.random.normal(kbe, (fan_out,), jnp.float32)
            running_mean = 0.1 * jax.random.normal(km, (fan_out,), jnp.float32)
            running_var = 1.0 + 0.1 * jnp.abs(
                jax.random.normal(kv, (fan_out,), jnp.float32))
            layer.update(gamma=gamma, beta=beta,
                         running_mean=running_mean, running_var=running_var)
        params.append(layer)
    return params


def _fold_bn(layer):
    """Fold eval-mode BatchNorm1d into the preceding Linear (in f32)."""
    inv_std = 1.0 / jnp.sqrt(layer["running_var"] + BN_EPS)
    scale = layer["gamma"] * inv_std                       # (N,)
    shift = layer["beta"] - layer["running_mean"] * scale  # (N,)
    w = layer["w"] * scale[None, :]
    b = layer["b"] * scale + shift
    return w, b


def waist_pred_net(x, params, *, block_m=1024, matmul_dtype=jnp.bfloat16,
                   single_buffer_params=True):
    """JAX wrapper: fold BN into the weights, call the batch-tiled kernel."""
    B, F = x.shape

    # Batch tile: multiple of 8 (sublanes), capped at block_m. Large default
    # (1024) amortizes the ~0.35us per-grid-step overhead. For B >= 16 make
    # sure the parallel batch grid has >= 2 steps so both TensorCores on v7x
    # get work (no-op on v5e/v6e which have a single TC).
    b8 = _round_up(B, 8)
    tm = min(block_m, b8)
    if b8 >= 16 and b8 // tm < 2:
        tm = _round_up((b8 + 1) // 2, 8)
    b_pad = _round_up(B, tm)
    if b_pad != B:
        x = jnp.pad(x, ((0, b_pad - B), (0, 0)))
    grid = (b_pad // tm,)

    # Parameter blocks never change across the grid -> keep them VMEM-resident
    # and (when supported) single-buffered so the pipeliner doesn't waste VMEM
    # double-buffering constant data.
    if single_buffer_params:
        def const_spec(shape):
            return pl.BlockSpec(shape, lambda i: (0, 0),
                                pipeline_mode=pl.Buffered(1))
    else:
        def const_spec(shape):
            return pl.BlockSpec(shape, lambda i: (0, 0))

    inputs = [x]
    in_specs = [pl.BlockSpec((tm, F), lambda i: (i, 0))]

    for li, layer in enumerate(params):
        if li < len(HIDDEN):
            # BN fold in f32 FIRST, then cast to the matmul dtype (bf16 by
            # default: MXU-native on all of v5e/v6e/v7x).
            w, b = _fold_bn(layer)
            inputs.append(w.astype(matmul_dtype))
            in_specs.append(const_spec(w.shape))
            inputs.append(b.reshape(1, -1).astype(jnp.float32))
            in_specs.append(const_spec((1, w.shape[1])))
        else:
            # Final Linear(32, 1): weight as a (1, 32) row for the VPU reduce,
            # bias as (1, 1). Kept f32 (tiny, and it feeds the VPU not MXU).
            w_row = layer["w"].reshape(1, -1).astype(jnp.float32)
            b_out = layer["b"].reshape(1, 1).astype(jnp.float32)
            inputs.append(w_row)
            in_specs.append(const_spec(w_row.shape))
            inputs.append(b_out)
            in_specs.append(const_spec((1, 1)))

    out = pl.pallas_call(
        _mlp_kernel,
        out_shape=jax.ShapeDtypeStruct((b_pad, OUT_DIM), jnp.float32),
        grid=grid,
        in_specs=in_specs,
        out_specs=pl.BlockSpec((tm, OUT_DIM), lambda i: (i, 0)),
        compiler_params=pltpu.CompilerParams(
            dimension_semantics=("parallel",)),
    )(*inputs)
    return out[:B]


def waist_pred_net_ref(x, params):
    """Pure-JAX reference (eval-mode semantics) for correctness checking."""
    h = x.astype(jnp.float32)
    for li, layer in enumerate(params):
        h = h @ layer["w"] + layer["b"]
        if li < len(HIDDEN):
            inv_std = 1.0 / jnp.sqrt(layer["running_var"] + BN_EPS)
            h = (h - layer["running_mean"]) * inv_std * layer["gamma"] + layer["beta"]
            h = jnp.where(h >= 0, h, NEG_SLOPE * h)
    return h


if __name__ == "__main__":
    INPUT_FEATURES = 64
    BATCH = 8

    key = jax.random.PRNGKey(0)
    kx, kp = jax.random.split(key)
    x = jax.random.normal(kx, (BATCH, INPUT_FEATURES), jnp.float32)
    params = make_params(INPUT_FEATURES, kp)
    ref = waist_pred_net_ref(x, params)

    def build(**kw):
        return jax.jit(functools.partial(waist_pred_net, params=params, **kw))

    # Default (performance) path: bf16 matmuls, f32 accumulate.
    sb = True
    try:
        out = build(single_buffer_params=sb)(x)
    except Exception:
        # pipeline_mode=pl.Buffered(1) not supported on this jax version:
        # fall back to default (double-buffered) parameter blocks.
        sb = False
        out = build(single_buffer_params=sb)(x)
    jax.block_until_ready(out)
    assert out.shape == (BATCH, 1), out.shape
    # bf16 quantization tolerance (expected, not a bug).
    assert jnp.allclose(out, ref, atol=1e-1, rtol=1e-1), (
        f"bf16 max err {jnp.max(jnp.abs(out - ref))}")

    # f32 matmul path: tight numerical check against the reference.
    out_f32 = build(matmul_dtype=jnp.float32, single_buffer_params=sb)(x)
    jax.block_until_ready(out_f32)
    assert jnp.allclose(out_f32, ref, atol=1e-4, rtol=1e-4), (
        f"f32 max err {jnp.max(jnp.abs(out_f32 - ref))}")

    print("KERNEL_OK")
</pallas_src>

<mosaic_0001>
module attributes {stable_mosaic.version = 11 : i64} {
  func.func @_mlp_kernel(%arg0: i32, %arg1: memref<8x64xf32, #tpu.memory_space<vmem>>, %arg2: memref<64x512xbf16, #tpu.memory_space<vmem>>, %arg3: memref<1x512xf32, #tpu.memory_space<vmem>>, %arg4: memref<512x256xbf16, #tpu.memory_space<vmem>>, %arg5: memref<1x256xf32, #tpu.memory_space<vmem>>, %arg6: memref<256x128xbf16, #tpu.memory_space<vmem>>, %arg7: memref<1x128xf32, #tpu.memory_space<vmem>>, %arg8: memref<128x64xbf16, #tpu.memory_space<vmem>>, %arg9: memref<1x64xf32, #tpu.memory_space<vmem>>, %arg10: memref<64x32xbf16, #tpu.memory_space<vmem>>, %arg11: memref<1x32xf32, #tpu.memory_space<vmem>>, %arg12: memref<1x32xf32, #tpu.memory_space<vmem>>, %arg13: memref<1x1xf32, #tpu.memory_space<vmem>>, %arg14: memref<8x1xf32, #tpu.memory_space<vmem>>) attributes {dimension_semantics = [#tpu.dimension_semantics<parallel>], iteration_bounds = array<i64: 1>, scalar_prefetch = 0 : i64, scratch_operands = 0 : i64, tpu.core_type = #tpu.core_type<tc>, window_params = [{transform_indices = @transform_0, window_bounds = array<i64: 8, 64>}, {pipeline_mode = #tpu.pipeline_mode<synchronous>, transform_indices = @transform_1, window_bounds = array<i64: 64, 512>}, {pipeline_mode = #tpu.pipeline_mode<synchronous>, transform_indices = @transform_2, window_bounds = array<i64: 1, 512>}, {pipeline_mode = #tpu.pipeline_mode<synchronous>, transform_indices = @transform_3, window_bounds = array<i64: 512, 256>}, {pipeline_mode = #tpu.pipeline_mode<synchronous>, transform_indices = @transform_4, window_bounds = array<i64: 1, 256>}, {pipeline_mode = #tpu.pipeline_mode<synchronous>, transform_indices = @transform_5, window_bounds = array<i64: 256, 128>}, {pipeline_mode = #tpu.pipeline_mode<synchronous>, transform_indices = @transform_6, window_bounds = array<i64: 1, 128>}, {pipeline_mode = #tpu.pipeline_mode<synchronous>, transform_indices = @transform_7, window_bounds = array<i64: 128, 64>}, {pipeline_mode = #tpu.pipeline_mode<synchronous>, transform_indices = @transform_8, window_bounds = array<i64: 1, 64>}, {pipeline_mode = #tpu.pipeline_mode<synchronous>, transform_indices = @transform_9, window_bounds = array<i64: 64, 32>}, {pipeline_mode = #tpu.pipeline_mode<synchronous>, transform_indices = @transform_10, window_bounds = array<i64: 1, 32>}, {pipeline_mode = #tpu.pipeline_mode<synchronous>, transform_indices = @transform_11, window_bounds = array<i64: 1, 32>}, {pipeline_mode = #tpu.pipeline_mode<synchronous>, transform_indices = @transform_12, window_bounds = array<i64: 1, 1>}, {transform_indices = @transform_13, window_bounds = array<i64: 8, 1>}]} {
    %c0 = arith.constant 0 : index
    %c0_0 = arith.constant 0 : index
    %0 = vector.load %arg1[%c0, %c0_0] : memref<8x64xf32, #tpu.memory_space<vmem>>, vector<8x64xf32>
    %1 = arith.truncf %0 : vector<8x64xf32> to vector<8x64xbf16>
    %c0_1 = arith.constant 0 : index
    %c0_2 = arith.constant 0 : index
    %2 = vector.load %arg2[%c0_1, %c0_2] : memref<64x512xbf16, #tpu.memory_space<vmem>>, vector<64x512xbf16>
    %cst = arith.constant dense<0.000000e+00> : vector<8x512xf32>
    %3 = tpu.matmul %1, %2, %cst {dimension_numbers = #tpu.dot_dimension_numbers<[1], [0], [0], [1], [0, 0, 1, 1], [], []>} : vector<8x64xbf16>, vector<64x512xbf16>, vector<8x512xf32> -> vector<8x512xf32>
    %c0_3 = arith.constant 0 : index
    %c0_4 = arith.constant 0 : index
    %4 = vector.load %arg3[%c0_3, %c0_4] : memref<1x512xf32, #tpu.memory_space<vmem>>, vector<1x512xf32>
    %5 = vector.broadcast %4 : vector<1x512xf32> to vector<8x512xf32>
    %6 = arith.addf %3, %5 : vector<8x512xf32>
    %cst_5 = arith.constant 2.000000e-01 : f32
    %7 = vector.broadcast %cst_5 : f32 to vector<8x512xf32>
    %8 = arith.mulf %7, %6 : vector<8x512xf32>
    %9 = arith.maximumf %6, %8 : vector<8x512xf32>
    %10 = arith.truncf %9 : vector<8x512xf32> to vector<8x512xbf16>
    %c0_6 = arith.constant 0 : index
    %c0_7 = arith.constant 0 : index
    %11 = vector.load %arg4[%c0_6, %c0_7] : memref<512x256xbf16, #tpu.memory_space<vmem>>, vector<512x256xbf16>
    %cst_8 = arith.constant dense<0.000000e+00> : vector<8x256xf32>
    %12 = tpu.matmul %10, %11, %cst_8 {dimension_numbers = #tpu.dot_dimension_numbers<[1], [0], [0], [1], [0, 0, 1, 1], [], []>} : vector<8x512xbf16>, vector<512x256xbf16>, vector<8x256xf32> -> vector<8x256xf32>
    %c0_9 = arith.constant 0 : index
    %c0_10 = arith.constant 0 : index
    %13 = vector.load %arg5[%c0_9, %c0_10] : memref<1x256xf32, #tpu.memory_space<vmem>>, vector<1x256xf32>
    %14 = vector.broadcast %13 : vector<1x256xf32> to vector<8x256xf32>
    %15 = arith.addf %12, %14 : vector<8x256xf32>
    %cst_11 = arith.constant 2.000000e-01 : f32
    %16 = vector.broadcast %cst_11 : f32 to vector<8x256xf32>
    %17 = arith.mulf %16, %15 : vector<8x256xf32>
    %18 = arith.maximumf %15, %17 : vector<8x256xf32>
    %19 = arith.truncf %18 : vector<8x256xf32> to vector<8x256xbf16>
    %c0_12 = arith.constant 0 : index
    %c0_13 = arith.constant 0 : index
    %20 = vector.load %arg6[%c0_12, %c0_13] : memref<256x128xbf16, #tpu.memory_space<vmem>>, vector<256x128xbf16>
    %cst_14 = arith.constant dense<0.000000e+00> : vector<8x128xf32>
    %21 = tpu.matmul %19, %20, %cst_14 {dimension_numbers = #tpu.dot_dimension_numbers<[1], [0], [0], [1], [0, 0, 1, 1], [], []>} : vector<8x256xbf16>, vector<256x128xbf16>, vector<8x128xf32> -> vector<8x128xf32>
    %c0_15 = arith.constant 0 : index
    %c0_16 = arith.constant 0 : index
    %22 = vector.load %arg7[%c0_15, %c0_16] : memref<1x128xf32, #tpu.memory_space<vmem>>, vector<1x128xf32>
    %23 = vector.broadcast %22 : vector<1x128xf32> to vector<8x128xf32>
    %24 = arith.addf %21, %23 : vector<8x128xf32>
    %cst_17 = arith.constant 2.000000e-01 : f32
    %25 = vector.broadcast %cst_17 : f32 to vector<8x128xf32>
    %26 = arith.mulf %25, %24 : vector<8x128xf32>
    %27 = arith.maximumf %24, %26 : vector<8x128xf32>
    %28 = arith.truncf %27 : vector<8x128xf32> to vector<8x128xbf16>
    %c0_18 = arith.constant 0 : index
    %c0_19 = arith.constant 0 : index
    %29 = vector.load %arg8[%c0_18, %c0_19] : memref<128x64xbf16, #tpu.memory_space<vmem>>, vector<128x64xbf16>
    %cst_20 = arith.constant dense<0.000000e+00> : vector<8x64xf32>
    %30 = tpu.matmul %28, %29, %cst_20 {dimension_numbers = #tpu.dot_dimension_numbers<[1], [0], [0], [1], [0, 0, 1, 1], [], []>} : vector<8x128xbf16>, vector<128x64xbf16>, vector<8x64xf32> -> vector<8x64xf32>
    %c0_21 = arith.constant 0 : index
    %c0_22 = arith.constant 0 : index
    %31 = vector.load %arg9[%c0_21, %c0_22] : memref<1x64xf32, #tpu.memory_space<vmem>>, vector<1x64xf32>
    %32 = vector.broadcast %31 : vector<1x64xf32> to vector<8x64xf32>
    %33 = arith.addf %30, %32 : vector<8x64xf32>
    %cst_23 = arith.constant 2.000000e-01 : f32
    %34 = vector.broadcast %cst_23 : f32 to vector<8x64xf32>
    %35 = arith.mulf %34, %33 : vector<8x64xf32>
    %36 = arith.maximumf %33, %35 : vector<8x64xf32>
    %37 = arith.truncf %36 : vector<8x64xf32> to vector<8x64xbf16>
    %c0_24 = arith.constant 0 : index
    %c0_25 = arith.constant 0 : index
    %38 = vector.load %arg10[%c0_24, %c0_25] : memref<64x32xbf16, #tpu.memory_space<vmem>>, vector<64x32xbf16>
    %cst_26 = arith.constant dense<0.000000e+00> : vector<8x32xf32>
    %39 = tpu.matmul %37, %38, %cst_26 {dimension_numbers = #tpu.dot_dimension_numbers<[1], [0], [0], [1], [0, 0, 1, 1], [], []>} : vector<8x64xbf16>, vector<64x32xbf16>, vector<8x32xf32> -> vector<8x32xf32>
    %c0_27 = arith.constant 0 : index
    %c0_28 = arith.constant 0 : index
    %40 = vector.load %arg11[%c0_27, %c0_28] : memref<1x32xf32, #tpu.memory_space<vmem>>, vector<1x32xf32>
    %41 = vector.broadcast %40 : vector<1x32xf32> to vector<8x32xf32>
    %42 = arith.addf %39, %41 : vector<8x32xf32>
    %cst_29 = arith.constant 2.000000e-01 : f32
    %43 = vector.broadcast %cst_29 : f32 to vector<8x32xf32>
    %44 = arith.mulf %43, %42 : vector<8x32xf32>
    %45 = arith.maximumf %42, %44 : vector<8x32xf32>
    %c0_30 = arith.constant 0 : index
    %c0_31 = arith.constant 0 : index
    %46 = vector.load %arg12[%c0_30, %c0_31] : memref<1x32xf32, #tpu.memory_space<vmem>>, vector<1x32xf32>
    %47 = vector.broadcast %46 : vector<1x32xf32> to vector<8x32xf32>
    %48 = arith.mulf %45, %47 : vector<8x32xf32>
    %cst_32 = arith.constant dense<0.000000e+00> : vector<8xf32>
    %49 = vector.multi_reduction <add>, %48, %cst_32 [1] : vector<8x32xf32> to vector<8xf32>
    %50 = vector.shape_cast %49 : vector<8xf32> to vector<8x1xf32>
    %c0_33 = arith.constant 0 : index
    %c0_34 = arith.constant 0 : index
    %51 = vector.load %arg13[%c0_33, %c0_34] : memref<1x1xf32, #tpu.memory_space<vmem>>, vector<1x1xf32>
    %52 = vector.broadcast %51 : vector<1x1xf32> to vector<8x1xf32>
    %53 = arith.addf %50, %52 : vector<8x1xf32>
    %c0_35 = arith.constant 0 : index
    %c0_36 = arith.constant 0 : index
    %54 = vector.load %arg14[%c0_35, %c0_36] : memref<8x1xf32, #tpu.memory_space<vmem>>, vector<8x1xf32>
    tpu.vector_store %arg14[%c0_35, %c0_36], %53 {strides = array<i32>} : memref<8x1xf32, #tpu.memory_space<vmem>>, vector<8x1xf32>,
    return
  }
  func.func @transform_0(%arg0: i32) -> (i32, i32) {
    %c0_i32 = arith.constant 0 : i32
    %c0_i32_0 = arith.constant 0 : i32
    return %arg0, %c0_i32 : i32, i32
  }
  func.func @transform_1(%arg0: i32) -> (i32, i32) {
    %c0_i32 = arith.constant 0 : i32
    %c0_i32_0 = arith.constant 0 : i32
    %c0_i32_1 = arith.constant 0 : i32
    return %c0_i32, %c0_i32_0 : i32, i32
  }
  func.func @transform_2(%arg0: i32) -> (i32, i32) {
    %c0_i32 = arith.constant 0 : i32
    %c0_i32_0 = arith.constant 0 : i32
    %c0_i32_1 = arith.constant 0 : i32
    return %c0_i32, %c0_i32_0 : i32, i32
  }
  func.func @transform_3(%arg0: i32) -> (i32, i32) {
    %c0_i32 = arith.constant 0 : i32
    %c0_i32_0 = arith.constant 0 : i32
    %c0_i32_1 = arith.constant 0 : i32
    return %c0_i32, %c0_i32_0 : i32, i32
  }
  func.func @transform_4(%arg0: i32) -> (i32, i32) {
    %c0_i32 = arith.constant 0 : i32
    %c0_i32_0 = arith.constant 0 : i32
    %c0_i32_1 = arith.constant 0 : i32
    return %c0_i32, %c0_i32_0 : i32, i32
  }
  func.func @transform_5(%arg0: i32) -> (i32, i32) {
    %c0_i32 = arith.constant 0 : i32
    %c0_i32_0 = arith.constant 0 : i32
    %c0_i32_1 = arith.constant 0 : i32
    return %c0_i32, %c0_i32_0 : i32, i32
  }
  func.func @transform_6(%arg0: i32) -> (i32, i32) {
    %c0_i32 = arith.constant 0 : i32
    %c0_i32_0 = arith.constant 0 : i32
    %c0_i32_1 = arith.constant 0 : i32
    return %c0_i32, %c0_i32_0 : i32, i32
  }
  func.func @transform_7(%arg0: i32) -> (i32, i32) {
    %c0_i32 = arith.constant 0 : i32
    %c0_i32_0 = arith.constant 0 : i32
    %c0_i32_1 = arith.constant 0 : i32
    return %c0_i32, %c0_i32_0 : i32, i32
  }
  func.func @transform_8(%arg0: i32) -> (i32, i32) {
    %c0_i32 = arith.constant 0 : i32
    %c0_i32_0 = arith.constant 0 : i32
    %c0_i32_1 = arith.constant 0 : i32
    return %c0_i32, %c0_i32_0 : i32, i32
  }
  func.func @transform_9(%arg0: i32) -> (i32, i32) {
    %c0_i32 = arith.constant 0 : i32
    %c0_i32_0 = arith.constant 0 : i32
    %c0_i32_1 = arith.constant 0 : i32
    return %c0_i32, %c0_i32_0 : i32, i32
  }
  func.func @transform_10(%arg0: i32) -> (i32, i32) {
    %c0_i32 = arith.constant 0 : i32
    %c0_i32_0 = arith.constant 0 : i32
    %c0_i32_1 = arith.constant 0 : i32
    return %c0_i32, %c0_i32_0 : i32, i32
  }
  func.func @transform_11(%arg0: i32) -> (i32, i32) {
    %c0_i32 = arith.constant 0 : i32
    %c0_i32_0 = arith.constant 0 : i32
    %c0_i32_1 = arith.constant 0 : i32
    return %c0_i32, %c0_i32_0 : i32, i32
  }
  func.func @transform_12(%arg0: i32) -> (i32, i32) {
    %c0_i32 = arith.constant 0 : i32
    %c0_i32_0 = arith.constant 0 : i32
    %c0_i32_1 = arith.constant 0 : i32
    return %c0_i32, %c0_i32_0 : i32, i32
  }
  func.func @transform_13(%arg0: i32) -> (i32, i32) {
    %c0_i32 = arith.constant 0 : i32
    %c0_i32_0 = arith.constant 0 : i32
    return %arg0, %c0_i32 : i32, i32
  }
}

module attributes {stable_mosaic.version = 11 : i64} {
  func.func @_mlp_kernel(%arg0: i32, %arg1: memref<8x64xf32, #tpu.memory_space<vmem>>, %arg2: memref<64x512xbf16, #tpu.memory_space<vmem>>, %arg3: memref<1x512xf32, #tpu.memory_space<vmem>>, %arg4: memref<512x256xbf16, #tpu.memory_space<vmem>>, %arg5: memref<1x256xf32, #tpu.memory_space<vmem>>, %arg6: memref<256x128xbf16, #tpu.memory_space<vmem>>, %arg7: memref<1x128xf32, #tpu.memory_space<vmem>>, %arg8: memref<128x64xbf16, #tpu.memory_space<vmem>>, %arg9: memref<1x64xf32, #tpu.memory_space<vmem>>, %arg10: memref<64x32xbf16, #tpu.memory_space<vmem>>, %arg11: memref<1x32xf32, #tpu.memory_space<vmem>>, %arg12: memref<1x32xf32, #tpu.memory_space<vmem>>, %arg13: memref<1x1xf32, #tpu.memory_space<vmem>>, %arg14: memref<8x1xf32, #tpu.memory_space<vmem>>) attributes {dimension_semantics = [#tpu.dimension_semantics<parallel>], iteration_bounds = array<i64: 1>, scalar_prefetch = 0 : i64, scratch_operands = 0 : i64, tpu.core_type = #tpu.core_type<tc>, window_params = [{transform_indices = @transform_0, window_bounds = array<i64: 8, 64>}, {pipeline_mode = #tpu.pipeline_mode<synchronous>, transform_indices = @transform_1, window_bounds = array<i64: 64, 512>}, {pipeline_mode = #tpu.pipeline_mode<synchronous>, transform_indices = @transform_2, window_bounds = array<i64: 1, 512>}, {pipeline_mode = #tpu.pipeline_mode<synchronous>, transform_indices = @transform_3, window_bounds = array<i64: 512, 256>}, {pipeline_mode = #tpu.pipeline_mode<synchronous>, transform_indices = @transform_4, window_bounds = array<i64: 1, 256>}, {pipeline_mode = #tpu.pipeline_mode<synchronous>, transform_indices = @transform_5, window_bounds = array<i64: 256, 128>}, {pipeline_mode = #tpu.pipeline_mode<synchronous>, transform_indices = @transform_6, window_bounds = array<i64: 1, 128>}, {pipeline_mode = #tpu.pipeline_mode<synchronous>, transform_indices = @transform_7, window_bounds = array<i64: 128, 64>}, {pipeline_mode = #tpu.pipeline_mode<synchronous>, transform_indices = @transform_8, window_bounds = array<i64: 1, 64>}, {pipeline_mode = #tpu.pipeline_mode<synchronous>, transform_indices = @transform_9, window_bounds = array<i64: 64, 32>}, {pipeline_mode = #tpu.pipeline_mode<synchronous>, transform_indices = @transform_10, window_bounds = array<i64: 1, 32>}, {pipeline_mode = #tpu.pipeline_mode<synchronous>, transform_indices = @transform_11, window_bounds = array<i64: 1, 32>}, {pipeline_mode = #tpu.pipeline_mode<synchronous>, transform_indices = @transform_12, window_bounds = array<i64: 1, 1>}, {transform_indices = @transform_13, window_bounds = array<i64: 8, 1>}]} {
    %c0 = arith.constant 0 : index
    %c0_0 = arith.constant 0 : index
    %0 = vector.load %arg1[%c0, %c0_0] : memref<8x64xf32, #tpu.memory_space<vmem>>, vector<8x64xf32>
    %1 = arith.truncf %0 : vector<8x64xf32> to vector<8x64xbf16>
    %c0_1 = arith.constant 0 : index
    %c0_2 = arith.constant 0 : index
    %2 = vector.load %arg2[%c0_1, %c0_2] : memref<64x512xbf16, #tpu.memory_space<vmem>>, vector<64x512xbf16>
    %cst = arith.constant dense<0.000000e+00> : vector<8x512xf32>
    %3 = tpu.matmul %1, %2, %cst {dimension_numbers = #tpu.dot_dimension_numbers<[1], [0], [0], [1], [0, 0, 1, 1], [], []>} : vector<8x64xbf16>, vector<64x512xbf16>, vector<8x512xf32> -> vector<8x512xf32>
    %c0_3 = arith.constant 0 : index
    %c0_4 = arith.constant 0 : index
    %4 = vector.load %arg3[%c0_3, %c0_4] : memref<1x512xf32, #tpu.memory_space<vmem>>, vector<1x512xf32>
    %5 = vector.broadcast %4 : vector<1x512xf32> to vector<8x512xf32>
    %6 = arith.addf %3, %5 : vector<8x512xf32>
    %cst_5 = arith.constant 2.000000e-01 : f32
    %7 = vector.broadcast %cst_5 : f32 to vector<8x512xf32>
    %8 = arith.mulf %7, %6 : vector<8x512xf32>
    %9 = arith.maximumf %6, %8 : vector<8x512xf32>
    %10 = arith.truncf %9 : vector<8x512xf32> to vector<8x512xbf16>
    %c0_6 = arith.constant 0 : index
    %c0_7 = arith.constant 0 : index
    %11 = vector.load %arg4[%c0_6, %c0_7] : memref<512x256xbf16, #tpu.memory_space<vmem>>, vector<512x256xbf16>
    %cst_8 = arith.constant dense<0.000000e+00> : vector<8x256xf32>
    %12 = tpu.matmul %10, %11, %cst_8 {dimension_numbers = #tpu.dot_dimension_numbers<[1], [0], [0], [1], [0, 0, 1, 1], [], []>} : vector<8x512xbf16>, vector<512x256xbf16>, vector<8x256xf32> -> vector<8x256xf32>
    %c0_9 = arith.constant 0 : index
    %c0_10 = arith.constant 0 : index
    %13 = vector.load %arg5[%c0_9, %c0_10] : memref<1x256xf32, #tpu.memory_space<vmem>>, vector<1x256xf32>
    %14 = vector.broadcast %13 : vector<1x256xf32> to vector<8x256xf32>
    %15 = arith.addf %12, %14 : vector<8x256xf32>
    %cst_11 = arith.constant 2.000000e-01 : f32
    %16 = vector.broadcast %cst_11 : f32 to vector<8x256xf32>
    %17 = arith.mulf %16, %15 : vector<8x256xf32>
    %18 = arith.maximumf %15, %17 : vector<8x256xf32>
    %19 = arith.truncf %18 : vector<8x256xf32> to vector<8x256xbf16>
    %c0_12 = arith.constant 0 : index
    %c0_13 = arith.constant 0 : index
    %20 = vector.load %arg6[%c0_12, %c0_13] : memref<256x128xbf16, #tpu.memory_space<vmem>>, vector<256x128xbf16>
    %cst_14 = arith.constant dense<0.000000e+00> : vector<8x128xf32>
    %21 = tpu.matmul %19, %20, %cst_14 {dimension_numbers = #tpu.dot_dimension_numbers<[1], [0], [0], [1], [0, 0, 1, 1], [], []>} : vector<8x256xbf16>, vector<256x128xbf16>, vector<8x128xf32> -> vector<8x128xf32>
    %c0_15 = arith.constant 0 : index
    %c0_16 = arith.constant 0 : index
    %22 = vector.load %arg7[%c0_15, %c0_16] : memref<1x128xf32, #tpu.memory_space<vmem>>, vector<1x128xf32>
    %23 = vector.broadcast %22 : vector<1x128xf32> to vector<8x128xf32>
    %24 = arith.addf %21, %23 : vector<8x128xf32>
    %cst_17 = arith.constant 2.000000e-01 : f32
    %25 = vector.broadcast %cst_17 : f32 to vector<8x128xf32>
    %26 = arith.mulf %25, %24 : vector<8x128xf32>
    %27 = arith.maximumf %24, %26 : vector<8x128xf32>
    %28 = arith.truncf %27 : vector<8x128xf32> to vector<8x128xbf16>
    %c0_18 = arith.constant 0 : index
    %c0_19 = arith.constant 0 : index
    %29 = vector.load %arg8[%c0_18, %c0_19] : memref<128x64xbf16, #tpu.memory_space<vmem>>, vector<128x64xbf16>
    %cst_20 = arith.constant dense<0.000000e+00> : vector<8x64xf32>
    %30 = tpu.matmul %28, %29, %cst_20 {dimension_numbers = #tpu.dot_dimension_numbers<[1], [0], [0], [1], [0, 0, 1, 1], [], []>} : vector<8x128xbf16>, vector<128x64xbf16>, vector<8x64xf32> -> vector<8x64xf32>
    %c0_21 = arith.constant 0 : index
    %c0_22 = arith.constant 0 : index
    %31 = vector.load %arg9[%c0_21, %c0_22] : memref<1x64xf32, #tpu.memory_space<vmem>>, vector<1x64xf32>
    %32 = vector.broadcast %31 : vector<1x64xf32> to vector<8x64xf32>
    %33 = arith.addf %30, %32 : vector<8x64xf32>
    %cst_23 = arith.constant 2.000000e-01 : f32
    %34 = vector.broadcast %cst_23 : f32 to vector<8x64xf32>
    %35 = arith.mulf %34, %33 : vector<8x64xf32>
    %36 = arith.maximumf %33, %35 : vector<8x64xf32>
    %37 = arith.truncf %36 : vector<8x64xf32> to vector<8x64xbf16>
    %c0_24 = arith.constant 0 : index
    %c0_25 = arith.constant 0 : index
    %38 = vector.load %arg10[%c0_24, %c0_25] : memref<64x32xbf16, #tpu.memory_space<vmem>>, vector<64x32xbf16>
    %cst_26 = arith.constant dense<0.000000e+00> : vector<8x32xf32>
    %39 = tpu.matmul %37, %38, %cst_26 {dimension_numbers = #tpu.dot_dimension_numbers<[1], [0], [0], [1], [0, 0, 1, 1], [], []>} : vector<8x64xbf16>, vector<64x32xbf16>, vector<8x32xf32> -> vector<8x32xf32>
    %c0_27 = arith.constant 0 : index
    %c0_28 = arith.constant 0 : index
    %40 = vector.load %arg11[%c0_27, %c0_28] : memref<1x32xf32, #tpu.memory_space<vmem>>, vector<1x32xf32>
    %41 = vector.broadcast %40 : vector<1x32xf32> to vector<8x32xf32>
    %42 = arith.addf %39, %41 : vector<8x32xf32>
    %cst_29 = arith.constant 2.000000e-01 : f32
    %43 = vector.broadcast %cst_29 : f32 to vector<8x32xf32>
    %44 = arith.mulf %43, %42 : vector<8x32xf32>
    %45 = arith.maximumf %42, %44 : vector<8x32xf32>
    %c0_30 = arith.constant 0 : index
    %c0_31 = arith.constant 0 : index
    %46 = vector.load %arg12[%c0_30, %c0_31] : memref<1x32xf32, #tpu.memory_space<vmem>>, vector<1x32xf32>
    %47 = vector.broadcast %46 : vector<1x32xf32> to vector<8x32xf32>
    %48 = arith.mulf %45, %47 : vector<8x32xf32>
    %cst_32 = arith.constant dense<0.000000e+00> : vector<8xf32>
    %49 = vector.multi_reduction <add>, %48, %cst_32 [1] : vector<8x32xf32> to vector<8xf32>
    %50 = vector.shape_cast %49 : vector<8xf32> to vector<8x1xf32>
    %c0_33 = arith.constant 0 : index
    %c0_34 = arith.constant 0 : index
    %51 = vector.load %arg13[%c0_33, %c0_34] : memref<1x1xf32, #tpu.memory_space<vmem>>, vector<1x1xf32>
    %52 = vector.broadcast %51 : vector<1x1xf32> to vector<8x1xf32>
    %53 = arith.addf %50, %52 : vector<8x1xf32>
    %c0_35 = arith.constant 0 : index
    %c0_36 = arith.constant 0 : index
    %54 = vector.load %arg14[%c0_35, %c0_36] : memref<8x1xf32, #tpu.memory_space<vmem>>, vector<8x1xf32>
    tpu.vector_store %arg14[%c0_35, %c0_36], %53 {strides = array<i32>} : memref<8x1xf32, #tpu.memory_space<vmem>>, vector<8x1xf32>,
    return
  }
  func.func @transform_0(%arg0: i32) -> (i32, i32) {
    %c0_i32 = arith.constant 0 : i32
    %c0_i32_0 = arith.constant 0 : i32
    return %arg0, %c0_i32 : i32, i32
  }
  func.func @transform_1(%arg0: i32) -> (i32, i32) {
    %c0_i32 = arith.constant 0 : i32
    %c0_i32_0 = arith.constant 0 : i32
    %c0_i32_1 = arith.constant 0 : i32
    return %c0_i32, %c0_i32_0 : i32, i32
  }
  func.func @transform_2(%arg0: i32) -> (i32, i32) {
    %c0_i32 = arith.constant 0 : i32
    %c0_i32_0 = arith.constant 0 : i32
    %c0_i32_1 = arith.constant 0 : i32
    return %c0_i32, %c0_i32_0 : i32, i32
  }
  func.func @transform_3(%arg0: i32) -> (i32, i32) {
    %c0_i32 = arith.constant 0 : i32
    %c0_i32_0 = arith.constant 0 : i32
    %c0_i32_1 = arith.constant 0 : i32
    return %c0_i32, %c0_i32_0 : i32, i32
  }
  func.func @transform_4(%arg0: i32) -> (i32, i32) {
    %c0_i32 = arith.constant 0 : i32
    %c0_i32_0 = arith.constant 0 : i32
    %c0_i32_1 = arith.constant 0 : i32
    return %c0_i32, %c0_i32_0 : i32, i32
  }
  func.func @transform_5(%arg0: i32) -> (i32, i32) {
    %c0_i32 = arith.constant 0 : i32
    %c0_i32_0 = arith.constant 0 : i32
    %c0_i32_1 = arith.constant 0 : i32
    return %c0_i32, %c0_i32_0 : i32, i32
  }
  func.func @transform_6(%arg0: i32) -> (i32, i32) {
    %c0_i32 = arith.constant 0 : i32
    %c0_i32_0 = arith.constant 0 : i32
    %c0_i32_1 = arith.constant 0 : i32
    return %c0_i32, %c0_i32_0 : i32, i32
  }
  func.func @transform_7(%arg0: i32) -> (i32, i32) {
    %c0_i32 = arith.constant 0 : i32
    %c0_i32_0 = arith.constant 0 : i32
    %c0_i32_1 = arith.constant 0 : i32
    return %c0_i32, %c0_i32_0 : i32, i32
  }
  func.func @transform_8(%arg0: i32) -> (i32, i32) {
    %c0_i32 = arith.constant 0 : i32
    %c0_i32_0 = arith.constant 0 : i32
    %c0_i32_1 = arith.constant 0 : i32
    return %c0_i32, %c0_i32_0 : i32, i32
  }
  func.func @transform_9(%arg0: i32) -> (i32, i32) {
    %c0_i32 = arith.constant 0 : i32
    %c0_i32_0 = arith.constant 0 : i32
    %c0_i32_1 = arith.constant 0 : i32
    return %c0_i32, %c0_i32_0 : i32, i32
  }
  func.func @transform_10(%arg0: i32) -> (i32, i32) {
    %c0_i32 = arith.constant 0 : i32
    %c0_i32_0 = arith.constant 0 : i32
    %c0_i32_1 = arith.constant 0 : i32
    return %c0_i32, %c0_i32_0 : i32, i32
  }
  func.func @transform_11(%arg0: i32) -> (i32, i32) {
    %c0_i32 = arith.constant 0 : i32
    %c0_i32_0 = arith.constant 0 : i32
    %c0_i32_1 = arith.constant 0 : i32
    return %c0_i32, %c0_i32_0 : i32, i32
  }
  func.func @transform_12(%arg0: i32) -> (i32, i32) {
    %c0_i32 = arith.constant 0 : i32
    %c0_i32_0 = arith.constant 0 : i32
    %c0_i32_1 = arith.constant 0 : i32
    return %c0_i32, %c0_i32_0 : i32, i32
  }
  func.func @transform_13(%arg0: i32) -> (i32, i32) {
    %c0_i32 = arith.constant 0 : i32
    %c0_i32_0 = arith.constant 0 : i32
    return %arg0, %c0_i32 : i32, i32
  }
}

</mosaic_0001>

<llo_original>
// kernel: waist_pred_net.1
$region0: #{waist_pred_net.1}
  #allocation0 [shape = 'u32[]', space=smem, size = 0x4, offset = 0x4, fixed_abs, tag = 'smem constant byte address 0x4 - core index']
  #allocation1 [shape = 'u32[72,128]{1,0:T(1,128)}', space=vmem, size = 0x9000, scoped, tag = 'internal scratch']
  #allocation2 [shape = 'f32[1,1]{1,0:T(1,128)S(1)}', space=vmem, size = 0x200, scoped, tag = 'scoped memory for waist_pred_net.1']
  %s0 = inlined_call_operand.hbm [shape: f32[8,64], index: 0, kind: input, shape index: {}]
  %s1 = inlined_call_operand.hbm [shape: bf16[64,512], index: 1, kind: input, shape index: {}]
  %s2 = inlined_call_operand.vmem [shape: f32[1,512], index: 2, kind: input, shape index: {}]
  %s3 = inlined_call_operand.hbm [shape: bf16[512,256], index: 3, kind: input, shape index: {}]
  %s4 = inlined_call_operand.hbm [shape: f32[1,256], index: 4, kind: input, shape index: {}]
  %s5 = inlined_call_operand.hbm [shape: bf16[256,128], index: 5, kind: input, shape index: {}]
  %s6 = inlined_call_operand.vmem [shape: f32[1,128], index: 6, kind: input, shape index: {}]
  %s7 = inlined_call_operand.hbm [shape: bf16[128,64], index: 7, kind: input, shape index: {}]
  %s8 = inlined_call_operand.hbm [shape: f32[1,64], index: 8, kind: input, shape index: {}]
  %s9 = inlined_call_operand.hbm [shape: bf16[64,32], index: 9, kind: input, shape index: {}]
  %s10 = inlined_call_operand.hbm [shape: f32[1,32], index: 10, kind: input, shape index: {}]
  %s11 = inlined_call_operand.hbm [shape: f32[1,32], index: 11, kind: input, shape index: {}]
  %s12 = inlined_call_operand.<no memory space> [shape: f32[1,1], index: 12, kind: input, shape index: {}]
  %s13 = inlined_call_operand.vmem [shape: f32[8,1], index: 13, kind: output, shape index: {}]
  %s14 = sld [smem:[#allocation0]]
  $region102: #{waist_pred_net.1} parent=0
    _
  %s16 = ssub.s32 1, %s14
  %s17 = scalar_select 0, %s16, %s14
  %v18 = vstv %s12
  %19 = vst [vmem:[#allocation2] sm:$0x1] %v18
  $region1: #{waist_pred_net.1} parent=0
    #allocation3 [shape = 'u8[4096]{0}', space=vmem, size = 0x1000, scoped, tag = 'input window, operand 0, single buffered']
    #allocation4 [shape = 's32[1]{0}', space=sflag, size = 0x4, scoped, tag = 'scoped memory for waist_pred_net.1']
    #allocation5 [shape = 'u8[65536]{0}', space=vmem, size = 0x10000, scoped, tag = 'input window, operand 1, single buffered']
    #allocation6 [shape = 's32[1]{0}', space=sflag, size = 0x4, scoped, tag = 'scoped memory for waist_pred_net.1']
    #allocation7 [shape = 'u8[262144]{0}', space=vmem, size = 0x40000, scoped, tag = 'input window, operand 3, single buffered']
    #allocation8 [shape = 'u8[1024]{0}', space=vmem, size = 0x400, scoped, tag = 'input window, operand 4, single buffered']
    #allocation9 [shape = 's32[1]{0}', space=sflag, size = 0x4, scoped, tag = 'scoped memory for waist_pred_net.1']
    #allocation10 [shape = 'u8[65536]{0}', space=vmem, size = 0x10000, scoped, tag = 'input window, operand 5, single buffered']
    #allocation11 [shape = 'u8[32768]{0}', space=vmem, size = 0x8000, scoped, tag = 'input window, operand 7, single buffered']
    #allocation12 [shape = 's32[1]{0}', space=sflag, size = 0x4, scoped, tag = 'scoped memory for waist_pred_net.1']
    #allocation13 [shape = 'u8[512]{0}', space=vmem, size = 0x400, scoped, tag = 'input window, operand 8, single buffered']
    #allocation14 [shape = 'u8[16384]{0}', space=vmem, size = 0x4000, scoped, tag = 'input window, operand 9, single buffered']
    #allocation15 [shape = 's32[1]{0}', space=sflag, size = 0x4, scoped, tag = 'scoped memory for waist_pred_net.1']
    #allocation16 [shape = 'u8[512]{0}', space=vmem, size = 0x400, scoped, tag = 'input window, operand 10, single buffered']
    #allocation17 [shape = 'u8[512]{0}', space=vmem, size = 0x400, scoped, tag = 'input window, operand 11, single buffered']
    #allocation18 [shape = 's32[1]{0}', space=sflag, size = 0x4, scoped, tag = 'scoped memory for waist_pred_net.1']
    %20 = vsyncpa [#allocation4], 0
    %21 = vsyncpa [#allocation6], 0
    %22 = vsyncpa [#allocation9], 0
    %23 = vsyncpa [#allocation12], 0
    %24 = vsyncpa [#allocation15], 0
    %25 = vsyncpa [#allocation18], 0
    // Predicated region
    $region2: #{waist_pred_net.1} parent=1 // pred_check
      _
    $region3: #{waist_pred_net.1} parent=1 // pred_check_branch
      %27 = sbr.rel (0) target = $region5
    $region4: #{waist_pred_net.1} parent=1 // pred_region
      %29 = vsyncadd [#allocation4], 0
      %s31 = sshll.u32 %s0, 4
      %s32 = int_to_ptr.hbm [resolvable:$true] %s31
      %s33 = sshll.u32 [#allocation3], 4
      %s34 = int_to_ptr.vmem [resolvable:$true] %s33
      %36 = dma.hbm_to_vmem [thread:$0]  %s32, 128, %s34, [#allocation4]
    $region5: #{waist_pred_net.1} parent=1 // pred_fallthru
      _
    // Predicated region
    $region6: #{waist_pred_net.1} parent=1 // pred_check
      _
    $region7: #{waist_pred_net.1} parent=1 // pred_check_branch
      %38 = sbr.rel (0) target = $region9
    $region8: #{waist_pred_net.1} parent=1 // pred_region
      %40 = vsyncadd [#allocation6], 0
      %s41 = sshll.u32 %s1, 4
      %s42 = int_to_ptr.hbm [resolvable:$true] %s41
      %s43 = sshll.u32 [#allocation5], 4
      %s44 = int_to_ptr.vmem [resolvable:$true] %s43
      %49 = dma.hbm_to_vmem [thread:$0]  %s42, 2048, %s44, [#allocation6], 256, 256, 16
    $region9: #{waist_pred_net.1} parent=1 // pred_fallthru
      _
    // Predicated region
    $region10: #{waist_pred_net.1} parent=1 // pred_check
      _
    $region11: #{waist_pred_net.1} parent=1 // pred_check_branch
      %51 = sbr.rel (0) target = $region13
    $region12: #{waist_pred_net.1} parent=1 // pred_region
      _
    $region13: #{waist_pred_net.1} parent=1 // pred_fallthru
      _
    // Predicated region
    $region14: #{waist_pred_net.1} parent=1 // pred_check
      _
    $region15: #{waist_pred_net.1} parent=1 // pred_check_branch
      %53 = sbr.rel (0) target = $region17
    $region16: #{waist_pred_net.1} parent=1 // pred_region
      %55 = vsyncadd [#allocation6], 0
      %s56 = sshll.u32 %s3, 4
      %s57 = int_to_ptr.hbm [resolvable:$true] %s56
      %s58 = sshll.u32 [#allocation7], 4
      %s59 = int_to_ptr.vmem [resolvable:$true] %s58
      %64 = dma.hbm_to_vmem [thread:$0]  %s57, 8192, %s59, [#allocation6], 128, 128, 8
    $region17: #{waist_pred_net.1} parent=1 // pred_fallthru
      _
    // Predicated region
    $region18: #{waist_pred_net.1} parent=1 // pred_check
      _
    $region19: #{waist_pred_net.1} parent=1 // pred_check_branch
      %66 = sbr.rel (0) target = $region21
    $region20: #{waist_pred_net.1} parent=1 // pred_region
      %68 = vsyncadd [#allocation9], 0
      %s70 = sshll.u32 %s4, 4
      %s71 = int_to_ptr.hbm [resolvable:$true] %s70
      %s72 = sshll.u32 [#allocation8], 4
      %s73 = int_to_ptr.vmem [resolvable:$true] %s72
      %75 = dma.hbm_to_vmem [thread:$0]  %s71, 32, %s73, [#allocation9]
    $region21: #{waist_pred_net.1} parent=1 // pred_fallthru
      _
    // Predicated region
    $region22: #{waist_pred_net.1} parent=1 // pred_check
      _
    $region23: #{waist_pred_net.1} parent=1 // pred_check_branch
      %77 = sbr.rel (0) target = $region25
    $region24: #{waist_pred_net.1} parent=1 // pred_region
      %79 = vsyncadd [#allocation9], 0
      %s80 = sshll.u32 %s5, 4
      %s81 = int_to_ptr.hbm [resolvable:$true] %s80
      %s82 = sshll.u32 [#allocation10], 4
      %s83 = int_to_ptr.vmem [resolvable:$true] %s82
      %88 = dma.hbm_to_vmem [thread:$0]  %s81, 2048, %s83, [#allocation9], 64, 64, 4
    $region25: #{waist_pred_net.1} parent=1 // pred_fallthru
      _
    // Predicated region
    $region26: #{waist_pred_net.1} parent=1 // pred_check
      _
    $region27: #{waist_pred_net.1} parent=1 // pred_check_branch
      %90 = sbr.rel (0) target = $region29
    $region28: #{waist_pred_net.1} parent=1 // pred_region
      _
    $region29: #{waist_pred_net.1} parent=1 // pred_fallthru
      _
    // Predicated region
    $region30: #{waist_pred_net.1} parent=1 // pred_check
      _
    $region31: #{waist_pred_net.1} parent=1 // pred_check_branch
      %92 = sbr.rel (0) target = $region33
    $region32: #{waist_pred_net.1} parent=1 // pred_region
      %94 = vsyncadd [#allocation12], 0
      %s95 = sshll.u32 %s7, 4
      %s96 = int_to_ptr.hbm [resolvable:$true] %s95
      %s97 = sshll.u32 [#allocation11], 4
      %s98 = int_to_ptr.vmem [resolvable:$true] %s97
      %103 = dma.hbm_to_vmem [thread:$0]  %s96, 1024, %s98, [#allocation12], 64, 64, 4
    $region33: #{waist_pred_net.1} parent=1 // pred_fallthru
      _
    // Predicated region
    $region34: #{waist_pred_net.1} parent=1 // pred_check
      _
    $region35: #{waist_pred_net.1} parent=1 // pred_check_branch
      %105 = sbr.rel (0) target = $region37
    $region36: #{waist_pred_net.1} parent=1 // pred_region
      %107 = vsyncadd [#allocation12], 0
      %s109 = sshll.u32 %s8, 4
      %s110 = int_to_ptr.hbm [resolvable:$true] %s109
      %s111 = sshll.u32 [#allocation13], 4
      %s112 = int_to_ptr.vmem [resolvable:$true] %s111
      %114 = dma.hbm_to_vmem [thread:$0]  %s110, 16, %s112, [#allocation12]
    $region37: #{waist_pred_net.1} parent=1 // pred_fallthru
      _
    // Predicated region
    $region38: #{waist_pred_net.1} parent=1 // pred_check
      _
    $region39: #{waist_pred_net.1} parent=1 // pred_check_branch
      %116 = sbr.rel (0) target = $region41
    $region40: #{waist_pred_net.1} parent=1 // pred_region
      %118 = vsyncadd [#allocation15], 0
      %s119 = sshll.u32 %s9, 4
      %s120 = int_to_ptr.hbm [resolvable:$true] %s119
      %s121 = sshll.u32 [#allocation14], 4
      %s122 = int_to_ptr.vmem [resolvable:$true] %s121
      %127 = dma.hbm_to_vmem [thread:$0]  %s120, 512, %s122, [#allocation15], 64, 64, 4
    $region41: #{waist_pred_net.1} parent=1 // pred_fallthru
      _
    // Predicated region
    $region42: #{waist_pred_net.1} parent=1 // pred_check
      _
    $region43: #{waist_pred_net.1} parent=1 // pred_check_branch
      %129 = sbr.rel (0) target = $region45
    $region44: #{waist_pred_net.1} parent=1 // pred_region
      %131 = vsyncadd [#allocation15], 0
      %s133 = sshll.u32 %s10, 4
      %s134 = int_to_ptr.hbm [resolvable:$true] %s133
      %s135 = sshll.u32 [#allocation16], 4
      %s136 = int_to_ptr.vmem [resolvable:$true] %s135
      %138 = dma.hbm_to_vmem [thread:$0]  %s134, 16, %s136, [#allocation15]
    $region45: #{waist_pred_net.1} parent=1 // pred_fallthru
      _
    // Predicated region
    $region46: #{waist_pred_net.1} parent=1 // pred_check
      _
    $region47: #{waist_pred_net.1} parent=1 // pred_check_branch
      %140 = sbr.rel (0) target = $region49
    $region48: #{waist_pred_net.1} parent=1 // pred_region
      %142 = vsyncadd [#allocation18], 0
      %s144 = sshll.u32 %s11, 4
      %s145 = int_to_ptr.hbm [resolvable:$true] %s144
      %s146 = sshll.u32 [#allocation17], 4
      %s147 = int_to_ptr.vmem [resolvable:$true] %s146
      %149 = dma.hbm_to_vmem [thread:$0]  %s145, 16, %s147, [#allocation18]
    $region49: #{waist_pred_net.1} parent=1 // pred_fallthru
      _
    // Predicated region
    $region50: #{waist_pred_net.1} parent=1 // pred_check
      _
    $region51: #{waist_pred_net.1} parent=1 // pred_check_branch
      %151 = sbr.rel (0) target = $region53
    $region52: #{waist_pred_net.1} parent=1 // pred_region
      _
    $region53: #{waist_pred_net.1} parent=1 // pred_fallthru
      _
    // Predicated region
    $region54: #{waist_pred_net.1} parent=1 // pred_check
      _
    $region55: #{waist_pred_net.1} parent=1 // pred_check_branch
      %153 = sbr.rel (0) target = $region57
    $region56: #{waist_pred_net.1} parent=1 // pred_region
      %155 = dma.done [#allocation4], 128
    $region57: #{waist_pred_net.1} parent=1 // pred_fallthru
      _
    // Predicated region
    $region58: #{waist_pred_net.1} parent=1 // pred_check
      _
    $region59: #{waist_pred_net.1} parent=1 // pred_check_branch
      %157 = sbr.rel (0) target = $region61
    $region60: #{waist_pred_net.1} parent=1 // pred_region
      %159 = dma.done [#allocation6], 2048
    $region61: #{waist_pred_net.1} parent=1 // pred_fallthru
      _
    // Predicated region
    $region62: #{waist_pred_net.1} parent=1 // pred_check
      _
    $region63: #{waist_pred_net.1} parent=1 // pred_check_branch
      %161 = sbr.rel (0) target = $region65
    $region64: #{waist_pred_net.1} parent=1 // pred_region
      %163 = dma.done [#allocation6], 8192
    $region65: #{waist_pred_net.1} parent=1 // pred_fallthru
      _
    // Predicated region
    $region66: #{waist_pred_net.1} parent=1 // pred_check
      _
    $region67: #{waist_pred_net.1} parent=1 // pred_check_branch
      %165 = sbr.rel (0) target = $region69
    $region68: #{waist_pred_net.1} parent=1 // pred_region
      %167 = dma.done [#allocation9], 32
    $region69: #{waist_pred_net.1} parent=1 // pred_fallthru
      _
    // Predicated region
    $region70: #{waist_pred_net.1} parent=1 // pred_check
      _
    $region71: #{waist_pred_net.1} parent=1 // pred_check_branch
      %169 = sbr.rel (0) target = $region73
    $region72: #{waist_pred_net.1} parent=1 // pred_region
      %171 = dma.done [#allocation9], 2048
    $region73: #{waist_pred_net.1} parent=1 // pred_fallthru
      _
    // Predicated region
    $region74: #{waist_pred_net.1} parent=1 // pred_check
      _
    $region75: #{waist_pred_net.1} parent=1 // pred_check_branch
      %173 = sbr.rel (0) target = $region77
    $region76: #{waist_pred_net.1} parent=1 // pred_region
      %175 = dma.done [#allocation12], 1024
    $region77: #{waist_pred_net.1} parent=1 // pred_fallthru
      _
    // Predicated region
    $region78: #{waist_pred_net.1} parent=1 // pred_check
      _
    $region79: #{waist_pred_net.1} parent=1 // pred_check_branch
      %177 = sbr.rel (0) target = $region81
    $region80: #{waist_pred_net.1} parent=1 // pred_region
      %179 = dma.done [#allocation12], 16
    $region81: #{waist_pred_net.1} parent=1 // pred_fallthru
      _
    // Predicated region
    $region82: #{waist_pred_net.1} parent=1 // pred_check
      _
    $region83: #{waist_pred_net.1} parent=1 // pred_check_branch
      %181 = sbr.rel (0) target = $region85
    $region84: #{waist_pred_net.1} parent=1 // pred_region
      %183 = dma.done [#allocation15], 512
    $region85: #{waist_pred_net.1} parent=1 // pred_fallthru
      _
    // Predicated region
    $region86: #{waist_pred_net.1} parent=1 // pred_check
      _
    $region87: #{waist_pred_net.1} parent=1 // pred_check_branch
      %185 = sbr.rel (0) target = $region89
    $region88: #{waist_pred_net.1} parent=1 // pred_region
      %187 = dma.done [#allocation15], 16
    $region89: #{waist_pred_net.1} parent=1 // pred_fallthru
      _
    // Predicated region
    $region90: #{waist_pred_net.1} parent=1 // pred_check
      _
    $region91: #{waist_pred_net.1} parent=1 // pred_check_branch
      %189 = sbr.rel (0) target = $region93
    $region92: #{waist_pred_net.1} parent=1 // pred_region
      %191 = dma.done [#allocation18], 16
    $region93: #{waist_pred_net.1} parent=1 // pred_fallthru
      _
    %v193 = vld [vmem:[#allocation3] sm:$0xff]
    %v194 = vpack.c.bf16 %v193, %v193
    %v195 = vld [vmem:[#allocation5] sm:$0xff]
    %v196 = vld [vmem:[#allocation5 + $0x8] sm:$0xff]
    %v197 = vld [vmem:[#allocation5 + $0x10] sm:$0xff]
    %v198 = vld [vmem:[#allocation5 + $0x18] sm:$0xff]
    %v199 = vld [vmem:[#allocation5 + $0x20] sm:$0xff]
    %v200 = vld [vmem:[#allocation5 + $0x28] sm:$0xff]
    %v201 = vld [vmem:[#allocation5 + $0x30] sm:$0xff]
    %v202 = vld [vmem:[#allocation5 + $0x38] sm:$0xff]
    %v203 = vld [vmem:[#allocation5 + $0x40] sm:$0xff]
    %v204 = vld [vmem:[#allocation5 + $0x48] sm:$0xff]
    %v205 = vld [vmem:[#allocation5 + $0x50] sm:$0xff]
    %v206 = vld [vmem:[#allocation5 + $0x58] sm:$0xff]
    %v207 = vld [vmem:[#allocation5 + $0x60] sm:$0xff]
    %v208 = vld [vmem:[#allocation5 + $0x68] sm:$0xff]
    %v209 = vld [vmem:[#allocation5 + $0x70] sm:$0xff]
    %v210 = vld [vmem:[#allocation5 + $0x78] sm:$0xff]
    %v211 = vld [vmem:[%s2] sm:$0xf]
    %v213 = vperm.slane %v211, 0
    %v214 = vperm.slane %v211, 1
    %v215 = vperm.slane %v211, 2
    %v216 = vperm.slane %v211, 3
    %v237 = vunpack.c.l.b16 %v195
    %v238 = vunpack.c.h.b16 %v195
    %v239 = vunpack.c.l.b16 %v196
    %v240 = vunpack.c.h.b16 %v196
    %v241 = vunpack.c.l.b16 %v197
    %v242 = vunpack.c.h.b16 %v197
    %v243 = vunpack.c.l.b16 %v198
    %v244 = vunpack.c.h.b16 %v198
    %v245 = vunpack.c.l.b16 %v199
    %v246 = vunpack.c.h.b16 %v199
    %v247 = vunpack.c.l.b16 %v200
    %v248 = vunpack.c.h.b16 %v200
    %v249 = vunpack.c.l.b16 %v201
    %v250 = vunpack.c.h.b16 %v201
    %v251 = vunpack.c.l.b16 %v202
    %v252 = vunpack.c.h.b16 %v202
    %v253 = vunpack.c.l.b16 %v203
    %v254 = vunpack.c.h.b16 %v203
    %v255 = vunpack.c.l.b16 %v204
    %v256 = vunpack.c.h.b16 %v204
    %v257 = vunpack.c.l.b16 %v205
    %v258 = vunpack.c.h.b16 %v205
    %v259 = vunpack.c.l.b16 %v206
    %v260 = vunpack.c.h.b16 %v206
    %v261 = vunpack.c.l.b16 %v207
    %v262 = vunpack.c.h.b16 %v207
    %v263 = vunpack.c.l.b16 %v208
    %v264 = vunpack.c.h.b16 %v208
    %v265 = vunpack.c.l.b16 %v209
    %v266 = vunpack.c.h.b16 %v209
    %v267 = vunpack.c.l.b16 %v210
    %v268 = vunpack.c.h.b16 %v210
    %v269 = vpack.c.b16 %v241, %v237
    %v270 = vpack.c.b16 %v242, %v238
    %v271 = vpack.c.b16 %v243, %v239
    %v272 = vpack.c.b16 %v244, %v240
    %v273 = vpack.c.b16 %v249, %v245
    %v274 = vpack.c.b16 %v250, %v246
    %v275 = vpack.c.b16 %v251, %v247
    %v276 = vpack.c.b16 %v252, %v248
    %v277 = vpack.c.b16 %v257, %v253
    %v278 = vpack.c.b16 %v258, %v254
    %v279 = vpack.c.b16 %v259, %v255
    %v280 = vpack.c.b16 %v260, %v256
    %v281 = vpack.c.b16 %v265, %v261
    %v282 = vpack.c.b16 %v266, %v262
    %v283 = vpack.c.b16 %v267, %v263
    %v284 = vpack.c.b16 %v268, %v264
    %vm301 = vcmask 523264
    %v303 = vsel %vm301, %v194, 0
    %305 = vmatpush.bf16.msra.mxu0 0
    %306 = vmatpush.bf16.msra.mxu0 0
    %307 = vmatpush.bf16.msra.mxu0 0
    %308 = vmatpush.bf16.msra.mxu0 0
    %309 = vmatpush.bf16.msra.mxu0 %v281
    %310 = vmatpush.bf16.msra.mxu0 %v277
    %311 = vmatpush.bf16.msra.mxu0 %v273
    %312 = vmatpush.bf16.msra.mxu0 %v269
    %313 = vmatmul.bf16.gmra.mxu0 %v303
    %v314 = vpop.f32.mrf.mxu0
    %v315 = vadd.f32 %v213, %v314
    %v316 = vpop.f32.mrf.mxu0
    %317 = vdwg.mxu0
    %318 = vmatpush.bf16.msra.mxu0 0
    %319 = vmatpush.bf16.msra.mxu0 0
    %320 = vmatpush.bf16.msra.mxu0 0
    %321 = vmatpush.bf16.msra.mxu0 0
    %322 = vmatpush.bf16.msra.mxu0 %v282
    %323 = vmatpush.bf16.msra.mxu0 %v278
    %324 = vmatpush.bf16.msra.mxu0 %v274
    %325 = vmatpush.bf16.msra.mxu0 %v270
    %326 = vmatmul.bf16.gmra.mxu0 %v303
    %v327 = vpop.f32.mrf.mxu0
    %v328 = vadd.f32 %v214, %v327
    %v329 = vpop.f32.mrf.mxu0
    %330 = vdwg.mxu0
    %331 = vmatpush.bf16.msra.mxu0 0
    %332 = vmatpush.bf16.msra.mxu0 0
    %333 = vmatpush.bf16.msra.mxu0 0
    %334 = vmatpush.bf16.msra.mxu0 0
    %335 = vmatpush.bf16.msra.mxu0 %v283
    %336 = vmatpush.bf16.msra.mxu0 %v279
    %337 = vmatpush.bf16.msra.mxu0 %v275
    %338 = vmatpush.bf16.msra.mxu0 %v271
    %339 = vmatmul.bf16.gmra.mxu0 %v303
    %v340 = vpop.f32.mrf.mxu0
    %v341 = vadd.f32 %v215, %v340
    %v342 = vpop.f32.mrf.mxu0
    %343 = vdwg.mxu0
    %344 = vmatpush.bf16.msra.mxu0 0
    %345 = vmatpush.bf16.msra.mxu0 0
    %346 = vmatpush.bf16.msra.mxu0 0
    %347 = vmatpush.bf16.msra.mxu0 0
    %348 = vmatpush.bf16.msra.mxu0 %v284
    %349 = vmatpush.bf16.msra.mxu0 %v280
    %350 = vmatpush.bf16.msra.mxu0 %v276
    %351 = vmatpush.bf16.msra.mxu0 %v272
    %352 = vmatmul.bf16.gmra.mxu0 %v303
    %v353 = vpop.f32.mrf.mxu0
    %v354 = vadd.f32 %v216, %v353
    %v355 = vpop.f32.mrf.mxu0
    %356 = vdwg.mxu0
    %v357 = vmul.f32 %v315, 0.2
    %v358 = vmul.f32 %v328, 0.2
    %v359 = vmul.f32 %v341, 0.2
    %v360 = vmul.f32 %v354, 0.2
    %v361 = vmax.f32 %v315, %v357
    %v362 = vmax.f32 %v328, %v358
    %v363 = vmax.f32 %v341, %v359
    %v364 = vmax.f32 %v354, %v360
    %v365 = vpack.c.bf16 %v361, %v361
    %v366 = vpack.c.bf16 %v362, %v362
    %v367 = vpack.c.bf16 %v363, %v363
    %v368 = vpack.c.bf16 %v364, %v364
    %v369 = vld [vmem:[#allocation7] sm:$0xff]
    %v370 = vld [vmem:[#allocation7 + $0x8] sm:$0xff]
    %v371 = vld [vmem:[#allocation7 + $0x10] sm:$0xff]
    %v372 = vld [vmem:[#allocation7 + $0x18] sm:$0xff]
    %v373 = vld [vmem:[#allocation7 + $0x20] sm:$0xff]
    %v374 = vld [vmem:[#allocation7 + $0x28] sm:$0xff]
    %v375 = vld [vmem:[#allocation7 + $0x30] sm:$0xff]
    %v376 = vld [vmem:[#allocation7 + $0x38] sm:$0xff]
    %v377 = vld [vmem:[#allocation7 + $0x40] sm:$0xff]
    %v378 = vld [vmem:[#allocation7 + $0x48] sm:$0xff]
    %v379 = vld [vmem:[#allocation7 + $0x50] sm:$0xff]
    %v380 = vld [vmem:[#allocation7 + $0x58] sm:$0xff]
    %v381 = vld [vmem:[#allocation7 + $0x60] sm:$0xff]
    %v382 = vld [vmem:[#allocation7 + $0x68] sm:$0xff]
    %v383 = vld [vmem:[#allocation7 + $0x70] sm:$0xff]
    %v384 = vld [vmem:[#allocation7 + $0x78] sm:$0xff]
    %v385 = vld [vmem:[#allocation7 + $0x80] sm:$0xff]
    %v386 = vld [vmem:[#allocation7 + $0x88] sm:$0xff]
    %v387 = vld [vmem:[#allocation7 + $0x90] sm:$0xff]
    %v388 = vld [vmem:[#allocation7 + $0x98] sm:$0xff]
    %v389 = vld [vmem:[#allocation7 + $0xa0] sm:$0xff]
    %v390 = vld [vmem:[#allocation7 + $0xa8] sm:$0xff]
    %v391 = vld [vmem:[#allocation7 + $0xb0] sm:$0xff]
    %v392 = vld [vmem:[#allocation7 + $0xb8] sm:$0xff]
    %v393 = vld [vmem:[#allocation7 + $0xc0] sm:$0xff]
    %v394 = vld [vmem:[#allocation7 + $0xc8] sm:$0xff]
    %v395 = vld [vmem:[#allocation7 + $0xd0] sm:$0xff]
    %v396 = vld [vmem:[#allocation7 + $0xd8] sm:$0xff]
    %v397 = vld [vmem:[#allocation7 + $0xe0] sm:$0xff]
    %v398 = vld [vmem:[#allocation7 + $0xe8] sm:$0xff]
    %v399 = vld [vmem:[#allocation7 + $0xf0] sm:$0xff]
    %v400 = vld [vmem:[#allocation7 + $0xf8] sm:$0xff]
    %v401 = vld [vmem:[#allocation7 + $0x100] sm:$0xff]
    %v402 = vld [vmem:[#allocation7 + $0x108] sm:$0xff]
    %v403 = vld [vmem:[#allocation7 + $0x110] sm:$0xff]
    %v404 = vld [vmem:[#allocation7 + $0x118] sm:$0xff]
    %v405 = vld [vmem:[#allocation7 + $0x120] sm:$0xff]
    %v406 = vld [vmem:[#allocation7 + $0x128] sm:$0xff]
    %v407 = vld [vmem:[#allocation7 + $0x130] sm:$0xff]
    %v408 = vld [vmem:[#allocation7 + $0x138] sm:$0xff]
    %v409 = vld [vmem:[#allocation7 + $0x140] sm:$0xff]
    %v410 = vld [vmem:[#allocation7 + $0x148] sm:$0xff]
    %v411 = vld [vmem:[#allocation7 + $0x150] sm:$0xff]
    %v412 = vld [vmem:[#allocation7 + $0x158] sm:$0xff]
    %v413 = vld [vmem:[#allocation7 + $0x160] sm:$0xff]
    %v414 = vld [vmem:[#allocation7 + $0x168] sm:$0xff]
    %v415 = vld [vmem:[#allocation7 + $0x170] sm:$0xff]
    %v416 = vld [vmem:[#allocation7 + $0x178] sm:$0xff]
    %v417 = vld [vmem:[#allocation7 + $0x180] sm:$0xff]
    %v418 = vld [vmem:[#allocation7 + $0x188] sm:$0xff]
    %v419 = vld [vmem:[#allocation7 + $0x190] sm:$0xff]
    %v420 = vld [vmem:[#allocation7 + $0x198] sm:$0xff]
    %v421 = vld [vmem:[#allocation7 + $0x1a0] sm:$0xff]
    %v422 = vld [vmem:[#allocation7 + $0x1a8] sm:$0xff]
    %v423 = vld [vmem:[#allocation7 + $0x1b0] sm:$0xff]
    %v424 = vld [vmem:[#allocation7 + $0x1b8] sm:$0xff]
    %v425 = vld [vmem:[#allocation7 + $0x1c0] sm:$0xff]
    %v426 = vld [vmem:[#allocation7 + $0x1c8] sm:$0xff]
    %v427 = vld [vmem:[#allocation7 + $0x1d0] sm:$0xff]
    %v428 = vld [vmem:[#allocation7 + $0x1d8] sm:$0xff]
    %v429 = vld [vmem:[#allocation7 + $0x1e0] sm:$0xff]
    %v430 = vld [vmem:[#allocation7 + $0x1e8] sm:$0xff]
    %v431 = vld [vmem:[#allocation7 + $0x1f0] sm:$0xff]
    %v432 = vld [vmem:[#allocation7 + $0x1f8] sm:$0xff]
    %v433 = vld [vmem:[#allocation8] sm:$0x3]
    %v435 = vperm.slane %v433, 0
    %v436 = vperm.slane %v433, 1
    %v503 = vunpack.c.l.b16 %v369
    %v504 = vunpack.c.h.b16 %v369
    %v505 = vunpack.c.l.b16 %v370
    %v506 = vunpack.c.h.b16 %v370
    %v507 = vunpack.c.l.b16 %v371
    %v508 = vunpack.c.h.b16 %v371
    %v509 = vunpack.c.l.b16 %v372
    %v510 = vunpack.c.h.b16 %v372
    %v511 = vunpack.c.l.b16 %v373
    %v512 = vunpack.c.h.b16 %v373
    %v513 = vunpack.c.l.b16 %v374
    %v514 = vunpack.c.h.b16 %v374
    %v515 = vunpack.c.l.b16 %v375
    %v516 = vunpack.c.h.b16 %v375
    %v517 = vunpack.c.l.b16 %v376
    %v518 = vunpack.c.h.b16 %v376
    %v519 = vunpack.c.l.b16 %v377
    %v520 = vunpack.c.h.b16 %v377
    %v521 = vunpack.c.l.b16 %v378
    %v522 = vunpack.c.h.b16 %v378
    %v523 = vunpack.c.l.b16 %v379
    %v524 = vunpack.c.h.b16 %v379
    %v525 = vunpack.c.l.b16 %v380
    %v526 = vunpack.c.h.b16 %v380
    %v527 = vunpack.c.l.b16 %v381
    %v528 = vunpack.c.h.b16 %v381
    %v529 = vunpack.c.l.b16 %v382
    %v530 = vunpack.c.h.b16 %v382
    %v531 = vunpack.c.l.b16 %v383
    %v532 = vunpack.c.h.b16 %v383
    %v533 = vunpack.c.l.b16 %v384
    %v534 = vunpack.c.h.b16 %v384
    %v535 = vunpack.c.l.b16 %v385
    %v536 = vunpack.c.h.b16 %v385
    %v537 = vunpack.c.l.b16 %v386
    %v538 = vunpack.c.h.b16 %v386
    %v539 = vunpack.c.l.b16 %v387
    %v540 = vunpack.c.h.b16 %v387
    %v541 = vunpack.c.l.b16 %v388
    %v542 = vunpack.c.h.b16 %v388
    %v543 = vunpack.c.l.b16 %v389
    %v544 = vunpack.c.h.b16 %v389
    %v545 = vunpack.c.l.b16 %v390
    %v546 = vunpack.c.h.b16 %v390
    %v547 = vunpack.c.l.b16 %v391
    %v548 = vunpack.c.h.b16 %v391
    %v549 = vunpack.c.l.b16 %v392
    %v550 = vunpack.c.h.b16 %v392
    %v551 = vunpack.c.l.b16 %v393
    %v552 = vunpack.c.h.b16 %v393
    %v553 = vunpack.c.l.b16 %v394
    %v554 = vunpack.c.h.b16 %v394
    %v555 = vunpack.c.l.b16 %v395
    %v556 = vunpack.c.h.b16 %v395
    %v557 = vunpack.c.l.b16 %v396
    %v558 = vunpack.c.h.b16 %v396
    %v559 = vunpack.c.l.b16 %v397
    %v560 = vunpack.c.h.b16 %v397
    %v561 = vunpack.c.l.b16 %v398
    %v562 = vunpack.c.h.b16 %v398
    %v563 = vunpack.c.l.b16 %v399
    %v564 = vunpack.c.h.b16 %v399
    %v565 = vunpack.c.l.b16 %v400
    %v566 = vunpack.c.h.b16 %v400
    %v567 = vunpack.c.l.b16 %v401
    %v568 = vunpack.c.h.b16 %v401
    %v569 = vunpack.c.l.b16 %v402
    %v570 = vunpack.c.h.b16 %v402
    %v571 = vunpack.c.l.b16 %v403
    %v572 = vunpack.c.h.b16 %v403
    %v573 = vunpack.c.l.b16 %v404
    %v574 = vunpack.c.h.b16 %v404
    %v575 = vunpack.c.l.b16 %v405
    %v576 = vunpack.c.h.b16 %v405
    %v577 = vunpack.c.l.b16 %v406
    %v578 = vunpack.c.h.b16 %v406
    %v579 = vunpack.c.l.b16 %v407
    %v580 = vunpack.c.h.b16 %v407
    %v581 = vunpack.c.l.b16 %v408
    %v582 = vunpack.c.h.b16 %v408
    %v583 = vunpack.c.l.b16 %v409
    %v584 = vunpack.c.h.b16 %v409
    %v585 = vunpack.c.l.b16 %v410
    %v586 = vunpack.c.h.b16 %v410
    %v587 = vunpack.c.l.b16 %v411
    %v588 = vunpack.c.h.b16 %v411
    %v589 = vunpack.c.l.b16 %v412
    %v590 = vunpack.c.h.b16 %v412
    %v591 = vunpack.c.l.b16 %v413
    %v592 = vunpack.c.h.b16 %v413
    %v593 = vunpack.c.l.b16 %v414
    %v594 = vunpack.c.h.b16 %v414
    %v595 = vunpack.c.l.b16 %v415
    %v596 = vunpack.c.h.b16 %v415
    %v597 = vunpack.c.l.b16 %v416
    %v598 = vunpack.c.h.b16 %v416
    %v599 = vunpack.c.l.b16 %v417
    %v600 = vunpack.c.h.b16 %v417
    %v601 = vunpack.c.l.b16 %v418
    %v602 = vunpack.c.h.b16 %v418
    %v603 = vunpack.c.l.b16 %v419
    %v604 = vunpack.c.h.b16 %v419
    %v605 = vunpack.c.l.b16 %v420
    %v606 = vunpack.c.h.b16 %v420
    %v607 = vunpack.c.l.b16 %v421
    %v608 = vunpack.c.h.b16 %v421
    %v609 = vunpack.c.l.b16 %v422
    %v610 = vunpack.c.h.b16 %v422
    %v611 = vunpack.c.l.b16 %v423
    %v612 = vunpack.c.h.b16 %v423
    %v613 = vunpack.c.l.b16 %v424
    %v614 = vunpack.c.h.b16 %v424
    %v615 = vunpack.c.l.b16 %v425
    %v616 = vunpack.c.h.b16 %v425
    %v617 = vunpack.c.l.b16 %v426
    %v618 = vunpack.c.h.b16 %v426
    %v619 = vunpack.c.l.b16 %v427
    %v620 = vunpack.c.h.b16 %v427
    %v621 = vunpack.c.l.b16 %v428
    %v622 = vunpack.c.h.b16 %v428
    %v623 = vunpack.c.l.b16 %v429
    %v624 = vunpack.c.h.b16 %v429
    %v625 = vunpack.c.l.b16 %v430
    %v626 = vunpack.c.h.b16 %v430
    %v627 = vunpack.c.l.b16 %v431
    %v628 = vunpack.c.h.b16 %v431
    %v629 = vunpack.c.l.b16 %v432
    %v630 = vunpack.c.h.b16 %v432
    %v631 = vpack.c.b16 %v505, %v503
    %v632 = vpack.c.b16 %v506, %v504
    %v633 = vpack.c.b16 %v509, %v507
    %v634 = vpack.c.b16 %v510, %v508
    %v635 = vpack.c.b16 %v513, %v511
    %v636 = vpack.c.b16 %v514, %v512
    %v637 = vpack.c.b16 %v517, %v515
    %v638 = vpack.c.b16 %v518, %v516
    %v639 = vpack.c.b16 %v521, %v519
    %v640 = vpack.c.b16 %v522, %v520
    %v641 = vpack.c.b16 %v525, %v523
    %v642 = vpack.c.b16 %v526, %v524
    %v643 = vpack.c.b16 %v529, %v527
    %v644 = vpack.c.b16 %v530, %v528
    %v645 = vpack.c.b16 %v533, %v531
    %v646 = vpack.c.b16 %v534, %v532
    %v647 = vpack.c.b16 %v537, %v535
    %v648 = vpack.c.b16 %v538, %v536
    %v649 = vpack.c.b16 %v541, %v539
    %v650 = vpack.c.b16 %v542, %v540
    %v651 = vpack.c.b16 %v545, %v543
    %v652 = vpack.c.b16 %v546, %v544
    %v653 = vpack.c.b16 %v549, %v547
    %v654 = vpack.c.b16 %v550, %v548
    %v655 = vpack.c.b16 %v553, %v551
    %v656 = vpack.c.b16 %v554, %v552
    %v657 = vpack.c.b16 %v557, %v555
    %v658 = vpack.c.b16 %v558, %v556
    %v659 = vpack.c.b16 %v561, %v559
    %v660 = vpack.c.b16 %v562, %v560
    %v661 = vpack.c.b16 %v565, %v563
    %v662 = vpack.c.b16 %v566, %v564
    %v663 = vpack.c.b16 %v569, %v567
    %v664 = vpack.c.b16 %v570, %v568
    %v665 = vpack.c.b16 %v573, %v571
    %v666 = vpack.c.b16 %v574, %v572
    %v667 = vpack.c.b16 %v577, %v575
    %v668 = vpack.c.b16 %v578, %v576
    %v669 = vpack.c.b16 %v581, %v579
    %v670 = vpack.c.b16 %v582, %v580
    %v671 = vpack.c.b16 %v585, %v583
    %v672 = vpack.c.b16 %v586, %v584
    %v673 = vpack.c.b16 %v589, %v587
    %v674 = vpack.c.b16 %v590, %v588
    %v675 = vpack.c.b16 %v593, %v591
    %v676 = vpack.c.b16 %v594, %v592
    %v677 = vpack.c.b16 %v597, %v595
    %v678 = vpack.c.b16 %v598, %v596
    %v679 = vpack.c.b16 %v601, %v599
    %v680 = vpack.c.b16 %v602, %v600
    %v681 = vpack.c.b16 %v605, %v603
    %v682 = vpack.c.b16 %v606, %v604
    %v683 = vpack.c.b16 %v609, %v607
    %v684 = vpack.c.b16 %v610, %v608
    %v685 = vpack.c.b16 %v613, %v611
    %v686 = vpack.c.b16 %v614, %v612
    %v687 = vpack.c.b16 %v617, %v615
    %v688 = vpack.c.b16 %v618, %v616
    %v689 = vpack.c.b16 %v621, %v619
    %v690 = vpack.c.b16 %v622, %v620
    %v691 = vpack.c.b16 %v625, %v623
    %v692 = vpack.c.b16 %v626, %v624
    %v693 = vpack.c.b16 %v629, %v627
    %v694 = vpack.c.b16 %v630, %v628
    %759 = vmatpush.bf16.msra.mxu0 %v645
    %760 = vmatpush.bf16.msra.mxu0 %v643
    %761 = vmatpush.bf16.msra.mxu0 %v641
    %762 = vmatpush.bf16.msra.mxu0 %v639
    %763 = vmatpush.bf16.msra.mxu0 %v637
    %764 = vmatpush.bf16.msra.mxu0 %v635
    %765 = vmatpush.bf16.msra.mxu0 %v633
    %766 = vmatpush.bf16.msra.mxu0 %v631
    %767 = vmatmul.bf16.gmra.mxu0 %v365
    %v768 = vpop.f32.mrf.mxu0
    %v769 = vadd.f32 %v435, %v768
    %v770 = vpop.f32.mrf.mxu0
    %771 = vdwg.mxu0
    %772 = vmatpush.bf16.msra.mxu0 %v661
    %773 = vmatpush.bf16.msra.mxu0 %v659
    %774 = vmatpush.bf16.msra.mxu0 %v657
    %775 = vmatpush.bf16.msra.mxu0 %v655
    %776 = vmatpush.bf16.msra.mxu0 %v653
    %777 = vmatpush.bf16.msra.mxu0 %v651
    %778 = vmatpush.bf16.msra.mxu0 %v649
    %779 = vmatpush.bf16.msra.mxu0 %v647
    %780 = vmatmul.bf16.gmra.mxu0 %v366
    %v781 = vpop.f32.mrf.mxu0
    %v782 = vadd.f32 %v769, %v781
    %v783 = vpop.f32.mrf.mxu0
    %784 = vdwg.mxu0
    %785 = vmatpush.bf16.msra.mxu0 %v677
    %786 = vmatpush.bf16.msra.mxu0 %v675
    %787 = vmatpush.bf16.msra.mxu0 %v673
    %788 = vmatpush.bf16.msra.mxu0 %v671
    %789 = vmatpush.bf16.msra.mxu0 %v669
    %790 = vmatpush.bf16.msra.mxu0 %v667
    %791 = vmatpush.bf16.msra.mxu0 %v665
    %792 = vmatpush.bf16.msra.mxu0 %v663
    %793 = vmatmul.bf16.gmra.mxu0 %v367
    %v794 = vpop.f32.mrf.mxu0
    %v795 = vadd.f32 %v782, %v794
    %v796 = vpop.f32.mrf.mxu0
    %797 = vdwg.mxu0
    %798 = vmatpush.bf16.msra.mxu0 %v693
    %799 = vmatpush.bf16.msra.mxu0 %v691
    %800 = vmatpush.bf16.msra.mxu0 %v689
    %801 = vmatpush.bf16.msra.mxu0 %v687
    %802 = vmatpush.bf16.msra.mxu0 %v685
    %803 = vmatpush.bf16.msra.mxu0 %v683
    %804 = vmatpush.bf16.msra.mxu0 %v681
    %805 = vmatpush.bf16.msra.mxu0 %v679
    %806 = vmatmul.bf16.gmra.mxu0 %v368
    %v807 = vpop.f32.mrf.mxu0
    %v808 = vadd.f32 %v795, %v807
    %v809 = vpop.f32.mrf.mxu0
    %810 = vdwg.mxu0
    %811 = vmatpush.bf16.msra.mxu0 %v646
    %812 = vmatpush.bf16.msra.mxu0 %v644
    %813 = vmatpush.bf16.msra.mxu0 %v642
    %814 = vmatpush.bf16.msra.mxu0 %v640
    %815 = vmatpush.bf16.msra.mxu0 %v638
    %816 = vmatpush.bf16.msra.mxu0 %v636
    %817 = vmatpush.bf16.msra.mxu0 %v634
    %818 = vmatpush.bf16.msra.mxu0 %v632
    %819 = vmatmul.bf16.gmra.mxu0 %v365
    %v820 = vpop.f32.mrf.mxu0
    %v821 = vadd.f32 %v436, %v820
    %v822 = vpop.f32.mrf.mxu0
    %823 = vdwg.mxu0
    %824 = vmatpush.bf16.msra.mxu0 %v662
    %825 = vmatpush.bf16.msra.mxu0 %v660
    %826 = vmatpush.bf16.msra.mxu0 %v658
    %827 = vmatpush.bf16.msra.mxu0 %v656
    %828 = vmatpush.bf16.msra.mxu0 %v654
    %829 = vmatpush.bf16.msra.mxu0 %v652
    %830 = vmatpush.bf16.msra.mxu0 %v650
    %831 = vmatpush.bf16.msra.mxu0 %v648
    %832 = vmatmul.bf16.gmra.mxu0 %v366
    %v833 = vpop.f32.mrf.mxu0
    %v834 = vadd.f32 %v821, %v833
    %v835 = vpop.f32.mrf.mxu0
    %836 = vdwg.mxu0
    %837 = vmatpush.bf16.msra.mxu0 %v678
    %838 = vmatpush.bf16.msra.mxu0 %v676
    %839 = vmatpush.bf16.msra.mxu0 %v674
    %840 = vmatpush.bf16.msra.mxu0 %v672
    %841 = vmatpush.bf16.msra.mxu0 %v670
    %842 = vmatpush.bf16.msra.mxu0 %v668
    %843 = vmatpush.bf16.msra.mxu0 %v666
    %844 = vmatpush.bf16.msra.mxu0 %v664
    %845 = vmatmul.bf16.gmra.mxu0 %v367
    %v846 = vpop.f32.mrf.mxu0
    %v847 = vadd.f32 %v834, %v846
    %v848 = vpop.f32.mrf.mxu0
    %849 = vdwg.mxu0
    %850 = vmatpush.bf16.msra.mxu0 %v694
    %851 = vmatpush.bf16.msra.mxu0 %v692
    %852 = vmatpush.bf16.msra.mxu0 %v690
    %853 = vmatpush.bf16.msra.mxu0 %v688
    %854 = vmatpush.bf16.msra.mxu0 %v686
    %855 = vmatpush.bf16.msra.mxu0 %v684
    %856 = vmatpush.bf16.msra.mxu0 %v682
    %857 = vmatpush.bf16.msra.mxu0 %v680
    %858 = vmatmul.bf16.gmra.mxu0 %v368
    %v859 = vpop.f32.mrf.mxu0
    %v860 = vadd.f32 %v847, %v859
    %v861 = vpop.f32.mrf.mxu0
    %862 = vdwg.mxu0
    %v863 = vmul.f32 %v808, 0.2
    %v864 = vmul.f32 %v860, 0.2
    %v865 = vmax.f32 %v808, %v863
    %v866 = vmax.f32 %v860, %v864
    %v867 = vpack.c.bf16 %v865, %v865
    %v868 = vpack.c.bf16 %v866, %v866
    %v869 = vld [vmem:[#allocation10] sm:$0xf]
    %v870 = vld [vmem:[#allocation10 + $0x4] sm:$0xf]
    %v871 = vld [vmem:[#allocation10 + $0x8] sm:$0xf]
    %v872 = vld [vmem:[#allocation10 + $0xc] sm:$0xf]
    %v873 = vld [vmem:[#allocation10 + $0x10] sm:$0xf]
    %v874 = vld [vmem:[#allocation10 + $0x14] sm:$0xf]
    %v875 = vld [vmem:[#allocation10 + $0x18] sm:$0xf]
    %v876 = vld [vmem:[#allocation10 + $0x1c] sm:$0xf]
    %v877 = vld [vmem:[#allocation10 + $0x20] sm:$0xf]
    %v878 = vld [vmem:[#allocation10 + $0x24] sm:$0xf]
    %v879 = vld [vmem:[#allocation10 + $0x28] sm:$0xf]
    %v880 = vld [vmem:[#allocation10 + $0x2c] sm:$0xf]
    %v881 = vld [vmem:[#allocation10 + $0x30] sm:$0xf]
    %v882 = vld [vmem:[#allocation10 + $0x34] sm:$0xf]
    %v883 = vld [vmem:[#allocation10 + $0x38] sm:$0xf]
    %v884 = vld [vmem:[#allocation10 + $0x3c] sm:$0xf]
    %v885 = vld [vmem:[#allocation10 + $0x40] sm:$0xf]
    %v886 = vld [vmem:[#allocation10 + $0x44] sm:$0xf]
    %v887 = vld [vmem:[#allocation10 + $0x48] sm:$0xf]
    %v888 = vld [vmem:[#allocation10 + $0x4c] sm:$0xf]
    %v889 = vld [vmem:[#allocation10 + $0x50] sm:$0xf]
    %v890 = vld [vmem:[#allocation10 + $0x54] sm:$0xf]
    %v891 = vld [vmem:[#allocation10 + $0x58] sm:$0xf]
    %v892 = vld [vmem:[#allocation10 + $0x5c] sm:$0xf]
    %v893 = vld [vmem:[#allocation10 + $0x60] sm:$0xf]
    %v894 = vld [vmem:[#allocation10 + $0x64] sm:$0xf]
    %v895 = vld [vmem:[#allocation10 + $0x68] sm:$0xf]
    %v896 = vld [vmem:[#allocation10 + $0x6c] sm:$0xf]
    %v897 = vld [vmem:[#allocation10 + $0x70] sm:$0xf]
    %v898 = vld [vmem:[#allocation10 + $0x74] sm:$0xf]
    %v899 = vld [vmem:[#allocation10 + $0x78] sm:$0xf]
    %v900 = vld [vmem:[#allocation10 + $0x7c] sm:$0xf]
    %v901 = vld [vmem:[%s6] sm:$0x1]
    %v903 = vperm.slane %v901, 0
    %v937 = vunpack.c.l.b16 %v869
    %v938 = vunpack.c.l.b16 %v870
    %v939 = vunpack.c.l.b16 %v871
    %v940 = vunpack.c.l.b16 %v872
    %v941 = vunpack.c.l.b16 %v873
    %v942 = vunpack.c.l.b16 %v874
    %v943 = vunpack.c.l.b16 %v875
    %v944 = vunpack.c.l.b16 %v876
    %v945 = vunpack.c.l.b16 %v877
    %v946 = vunpack.c.l.b16 %v878
    %v947 = vunpack.c.l.b16 %v879
    %v948 = vunpack.c.l.b16 %v880
    %v949 = vunpack.c.l.b16 %v881
    %v950 = vunpack.c.l.b16 %v882
    %v951 = vunpack.c.l.b16 %v883
    %v952 = vunpack.c.l.b16 %v884
    %v953 = vunpack.c.l.b16 %v885
    %v954 = vunpack.c.l.b16 %v886
    %v955 = vunpack.c.l.b16 %v887
    %v956 = vunpack.c.l.b16 %v888
    %v957 = vunpack.c.l.b16 %v889
    %v958 = vunpack.c.l.b16 %v890
    %v959 = vunpack.c.l.b16 %v891
    %v960 = vunpack.c.l.b16 %v892
    %v961 = vunpack.c.l.b16 %v893
    %v962 = vunpack.c.l.b16 %v894
    %v963 = vunpack.c.l.b16 %v895
    %v964 = vunpack.c.l.b16 %v896
    %v965 = vunpack.c.l.b16 %v897
    %v966 = vunpack.c.l.b16 %v898
    %v967 = vunpack.c.l.b16 %v899
    %v968 = vunpack.c.l.b16 %v900
    %v969 = vpack.c.b16 %v938, %v937
    %v970 = vpack.c.b16 %v940, %v939
    %v971 = vpack.c.b16 %v942, %v941
    %v972 = vpack.c.b16 %v944, %v943
    %v973 = vpack.c.b16 %v946, %v945
    %v974 = vpack.c.b16 %v948, %v947
    %v975 = vpack.c.b16 %v950, %v949
    %v976 = vpack.c.b16 %v952, %v951
    %v977 = vpack.c.b16 %v954, %v953
    %v978 = vpack.c.b16 %v956, %v955
    %v979 = vpack.c.b16 %v958, %v957
    %v980 = vpack.c.b16 %v960, %v959
    %v981 = vpack.c.b16 %v962, %v961
    %v982 = vpack.c.b16 %v964, %v963
    %v983 = vpack.c.b16 %v966, %v965
    %v984 = vpack.c.b16 %v968, %v967
    %1001 = vmatpush.bf16.msra.mxu0 %v976
    %1002 = vmatpush.bf16.msra.mxu0 %v975
    %1003 = vmatpush.bf16.msra.mxu0 %v974
    %1004 = vmatpush.bf16.msra.mxu0 %v973
    %1005 = vmatpush.bf16.msra.mxu0 %v972
    %1006 = vmatpush.bf16.msra.mxu0 %v971
    %1007 = vmatpush.bf16.msra.mxu0 %v970
    %1008 = vmatpush.bf16.msra.mxu0 %v969
    %1009 = vmatmul.bf16.gmra.mxu0 %v867
    %v1010 = vpop.f32.mrf.mxu0
    %v1011 = vadd.f32 %v903, %v1010
    %v1012 = vpop.f32.mrf.mxu0
    %1013 = vdwg.mxu0
    %1014 = vmatpush.bf16.msra.mxu0 %v984
    %1015 = vmatpush.bf16.msra.mxu0 %v983
    %1016 = vmatpush.bf16.msra.mxu0 %v982
    %1017 = vmatpush.bf16.msra.mxu0 %v981
    %1018 = vmatpush.bf16.msra.mxu0 %v980
    %1019 = vmatpush.bf16.msra.mxu0 %v979
    %1020 = vmatpush.bf16.msra.mxu0 %v978
    %1021 = vmatpush.bf16.msra.mxu0 %v977
    %1022 = vmatmul.bf16.gmra.mxu0 %v868
    %v1023 = vpop.f32.mrf.mxu0
    %v1024 = vadd.f32 %v1011, %v1023
    %v1025 = vpop.f32.mrf.mxu0
    %1026 = vdwg.mxu0
    %v1027 = vmul.f32 %v1024, 0.2
    %v1028 = vmax.f32 %v1024, %v1027
    %v1029 = vpack.c.bf16 %v1028, %v1028
    %v1030 = vld [vmem:[#allocation11] sm:$0xf]
    %v1031 = vld [vmem:[#allocation11 + $0x4] sm:$0xf]
    %v1032 = vld [vmem:[#allocation11 + $0x8] sm:$0xf]
    %v1033 = vld [vmem:[#allocation11 + $0xc] sm:$0xf]
    %v1034 = vld [vmem:[#allocation11 + $0x10] sm:$0xf]
    %v1035 = vld [vmem:[#allocation11 + $0x14] sm:$0xf]
    %v1036 = vld [vmem:[#allocation11 + $0x18] sm:$0xf]
    %v1037 = vld [vmem:[#allocation11 + $0x1c] sm:$0xf]
    %v1038 = vld [vmem:[#allocation11 + $0x20] sm:$0xf]
    %v1039 = vld [vmem:[#allocation11 + $0x24] sm:$0xf]
    %v1040 = vld [vmem:[#allocation11 + $0x28] sm:$0xf]
    %v1041 = vld [vmem:[#allocation11 + $0x2c] sm:$0xf]
    %v1042 = vld [vmem:[#allocation11 + $0x30] sm:$0xf]
    %v1043 = vld [vmem:[#allocation11 + $0x34] sm:$0xf]
    %v1044 = vld [vmem:[#allocation11 + $0x38] sm:$0xf]
    %v1045 = vld [vmem:[#allocation11 + $0x3c] sm:$0xf]
    %v1046 = vld [vmem:[#allocation13] sm:$0x1]
    %v1048 = vperm.slane %v1046, 0
    %v1066 = vunpack.c.l.b16 %v1030
    %v1067 = vunpack.c.l.b16 %v1031
    %v1068 = vunpack.c.l.b16 %v1032
    %v1069 = vunpack.c.l.b16 %v1033
    %v1070 = vunpack.c.l.b16 %v1034
    %v1071 = vunpack.c.l.b16 %v1035
    %v1072 = vunpack.c.l.b16 %v1036
    %v1073 = vunpack.c.l.b16 %v1037
    %v1074 = vunpack.c.l.b16 %v1038
    %v1075 = vunpack.c.l.b16 %v1039
    %v1076 = vunpack.c.l.b16 %v1040
    %v1077 = vunpack.c.l.b16 %v1041
    %v1078 = vunpack.c.l.b16 %v1042
    %v1079 = vunpack.c.l.b16 %v1043
    %v1080 = vunpack.c.l.b16 %v1044
    %v1081 = vunpack.c.l.b16 %v1045
    %v1082 = vpack.c.b16 %v1067, %v1066
    %v1083 = vpack.c.b16 %v1069, %v1068
    %v1084 = vpack.c.b16 %v1071, %v1070
    %v1085 = vpack.c.b16 %v1073, %v1072
    %v1086 = vpack.c.b16 %v1075, %v1074
    %v1087 = vpack.c.b16 %v1077, %v1076
    %v1088 = vpack.c.b16 %v1079, %v1078
    %v1089 = vpack.c.b16 %v1081, %v1080
    %1098 = vmatpush.bf16.msra.mxu0 %v1089
    %1099 = vmatpush.bf16.msra.mxu0 %v1088
    %1100 = vmatpush.bf16.msra.mxu0 %v1087
    %1101 = vmatpush.bf16.msra.mxu0 %v1086
    %1102 = vmatpush.bf16.msra.mxu0 %v1085
    %1103 = vmatpush.bf16.msra.mxu0 %v1084
    %1104 = vmatpush.bf16.msra.mxu0 %v1083
    %1105 = vmatpush.bf16.msra.mxu0 %v1082
    %1106 = vmatmul.bf16.gmra.mxu0 %v1029
    %v1107 = vpop.f32.mrf.mxu0
    %v1108 = vadd.f32 %v1048, %v1107
    %v1109 = vpop.f32.mrf.mxu0
    %1110 = vdwg.mxu0
    %v1111 = vmul.f32 %v1108, 0.2
    %v1112 = vmax.f32 %v1108, %v1111
    %v1113 = vpack.c.bf16 %v1112, %v1112
    %v1114 = vld [vmem:[#allocation14] sm:$0xf]
    %v1115 = vld [vmem:[#allocation14 + $0x4] sm:$0xf]
    %v1116 = vld [vmem:[#allocation14 + $0x8] sm:$0xf]
    %v1117 = vld [vmem:[#allocation14 + $0xc] sm:$0xf]
    %v1118 = vld [vmem:[#allocation14 + $0x10] sm:$0xf]
    %v1119 = vld [vmem:[#allocation14 + $0x14] sm:$0xf]
    %v1120 = vld [vmem:[#allocation14 + $0x18] sm:$0xf]
    %v1121 = vld [vmem:[#allocation14 + $0x1c] sm:$0xf]
    %v1122 = vld [vmem:[#allocation16] sm:$0x1]
    %v1124 = vperm.slane %v1122, 0
    %v1134 = vunpack.c.l.b16 %v1114
    %v1135 = vunpack.c.l.b16 %v1115
    %v1136 = vunpack.c.l.b16 %v1116
    %v1137 = vunpack.c.l.b16 %v1117
    %v1138 = vunpack.c.l.b16 %v1118
    %v1139 = vunpack.c.l.b16 %v1119
    %v1140 = vunpack.c.l.b16 %v1120
    %v1141 = vunpack.c.l.b16 %v1121
    %v1142 = vpack.c.b16 %v1135, %v1134
    %v1143 = vpack.c.b16 %v1137, %v1136
    %v1144 = vpack.c.b16 %v1139, %v1138
    %v1145 = vpack.c.b16 %v1141, %v1140
    %v1151 = vsel %vm301, %v1113, 0
    %1153 = vmatpush.bf16.msra.mxu0 0
    %1154 = vmatpush.bf16.msra.mxu0 0
    %1155 = vmatpush.bf16.msra.mxu0 0
    %1156 = vmatpush.bf16.msra.mxu0 0
    %1157 = vmatpush.bf16.msra.mxu0 %v1145
    %1158 = vmatpush.bf16.msra.mxu0 %v1144
    %1159 = vmatpush.bf16.msra.mxu0 %v1143
    %1160 = vmatpush.bf16.msra.mxu0 %v1142
    %1161 = vmatmul.bf16.gmra.mxu0 %v1151
    %v1162 = vpop.f32.mrf.mxu0
    %v1163 = vadd.f32 %v1124, %v1162
    %v1164 = vpop.f32.mrf.mxu0
    %1165 = vdwg.mxu0
    %v1166 = vmul.f32 %v1163, 0.2
    %v1167 = vmax.f32 %v1163, %v1166
    %v1168 = vld [vmem:[#allocation17] sm:$0x1]
    %v1170 = vperm.slane %v1168, 0
    %v1172 = vmul.f32 %v1167, %v1170
    %vm1173 = vcmask 261120
    %v1174 = vsel %vm1173, %v1172, 0.0
    %1175 = vadd.xlane.f32.xlu0 %v1174
    %v1176 = vpop.xlane.xlu0 %1175
    %v1177 = vld [vmem:[#allocation2] sm:$0x1]
    %v1179 = vperm.slane %v1177, 0
    %v1181 = vadd.f32 %v1176, %v1179
    %vm1182 = vcmask 7168
    %1183 = vst.msk [vmem:[%s13] sm:$0xff] %vm1182, %v1181
    // Predicated region
    $region94: #{waist_pred_net.1} parent=1 // pred_check
      _
    $region95: #{waist_pred_net.1} parent=1 // pred_check_branch
      %1185 = sbr.rel (0) target = $region97
    $region96: #{waist_pred_net.1} parent=1 // pred_region
      _
    $region97: #{waist_pred_net.1} parent=1 // pred_fallthru
      _
    // Predicated region
    $region98: #{waist_pred_net.1} parent=1 // pred_check
      _
    $region99: #{waist_pred_net.1} parent=1 // pred_check_branch
      %1187 = sbr.rel (0) target = $region101
    $region100: #{waist_pred_net.1} parent=1 // pred_region
      _
    $region101: #{waist_pred_net.1} parent=1 // pred_fallthru
      _
    %1188 = vsyncpa [#allocation4], 1
    %1189 = vsyncpa [#allocation6], 1
    %1190 = vsyncpa [#allocation9], 1
    %1191 = vsyncpa [#allocation12], 1
    %1192 = vsyncpa [#allocation15], 1
    %1193 = vsyncpa [#allocation18], 1

// kernel: waist_pred_net.1
$region0: #{waist_pred_net.1}
  #allocation0 [shape = 'u32[]', space=smem, size = 0x4, offset = 0x4, fixed_abs, tag = 'smem constant byte address 0x4 - core index']
  #allocation1 [shape = 'u32[72,128]{1,0:T(1,128)}', space=vmem, size = 0x9000, scoped, tag = 'internal scratch']
  #allocation2 [shape = 'f32[1,1]{1,0:T(1,128)S(1)}', space=vmem, size = 0x200, scoped, tag = 'scoped memory for waist_pred_net.1']
  %s0 = inlined_call_operand.hbm [shape: f32[8,64], index: 0, kind: input, shape index: {}]
  %s1 = inlined_call_operand.hbm [shape: bf16[64,512], index: 1, kind: input, shape index: {}]
  %s2 = inlined_call_operand.vmem [shape: f32[1,512], index: 2, kind: input, shape index: {}]
  %s3 = inlined_call_operand.hbm [shape: bf16[512,256], index: 3, kind: input, shape index: {}]
  %s4 = inlined_call_operand.hbm [shape: f32[1,256], index: 4, kind: input, shape index: {}]
  %s5 = inlined_call_operand.hbm [shape: bf16[256,128], index: 5, kind: input, shape index: {}]
  %s6 = inlined_call_operand.vmem [shape: f32[1,128], index: 6, kind: input, shape index: {}]
  %s7 = inlined_call_operand.hbm [shape: bf16[128,64], index: 7, kind: input, shape index: {}]
  %s8 = inlined_call_operand.hbm [shape: f32[1,64], index: 8, kind: input, shape index: {}]
  %s9 = inlined_call_operand.hbm [shape: bf16[64,32], index: 9, kind: input, shape index: {}]
  %s10 = inlined_call_operand.hbm [shape: f32[1,32], index: 10, kind: input, shape index: {}]
  %s11 = inlined_call_operand.hbm [shape: f32[1,32], index: 11, kind: input, shape index: {}]
  %s12 = inlined_call_operand.<no memory space> [shape: f32[1,1], index: 12, kind: input, shape index: {}]
  %s13 = inlined_call_operand.vmem [shape: f32[8,1], index: 13, kind: output, shape index: {}]
  %s14 = sld [smem:[#allocation0]]
  $region102: #{waist_pred_net.1} parent=0
    _
  %s16 = ssub.s32 1, %s14
  %s17 = scalar_select 0, %s16, %s14
  %v18 = vstv %s12
  %19 = vst [vmem:[#allocation2] sm:$0x1] %v18
  $region1: #{waist_pred_net.1} parent=0
    #allocation3 [shape = 'u8[4096]{0}', space=vmem, size = 0x1000, scoped, tag = 'input window, operand 0, single buffered']
    #allocation4 [shape = 's32[1]{0}', space=sflag, size = 0x4, scoped, tag = 'scoped memory for waist_pred_net.1']
    #allocation5 [shape = 'u8[65536]{0}', space=vmem, size = 0x10000, scoped, tag = 'input window, operand 1, single buffered']
    #allocation6 [shape = 's32[1]{0}', space=sflag, size = 0x4, scoped, tag = 'scoped memory for waist_pred_net.1']
    #allocation7 [shape = 'u8[262144]{0}', space=vmem, size = 0x40000, scoped, tag = 'input window, operand 3, single buffered']
    #allocation8 [shape = 'u8[1024]{0}', space=vmem, size = 0x400, scoped, tag = 'input window, operand 4, single buffered']
    #allocation9 [shape = 's32[1]{0}', space=sflag, size = 0x4, scoped, tag = 'scoped memory for waist_pred_net.1']
    #allocation10 [shape = 'u8[65536]{0}', space=vmem, size = 0x10000, scoped, tag = 'input window, operand 5, single buffered']
    #allocation11 [shape = 'u8[32768]{0}', space=vmem, size = 0x8000, scoped, tag = 'input window, operand 7, single buffered']
    #allocation12 [shape = 's32[1]{0}', space=sflag, size = 0x4, scoped, tag = 'scoped memory for waist_pred_net.1']
    #allocation13 [shape = 'u8[512]{0}', space=vmem, size = 0x400, scoped, tag = 'input window, operand 8, single buffered']
    #allocation14 [shape = 'u8[16384]{0}', space=vmem, size = 0x4000, scoped, tag = 'input window, operand 9, single buffered']
    #allocation15 [shape = 's32[1]{0}', space=sflag, size = 0x4, scoped, tag = 'scoped memory for waist_pred_net.1']
    #allocation16 [shape = 'u8[512]{0}', space=vmem, size = 0x400, scoped, tag = 'input window, operand 10, single buffered']
    #allocation17 [shape = 'u8[512]{0}', space=vmem, size = 0x400, scoped, tag = 'input window, operand 11, single buffered']
    #allocation18 [shape = 's32[1]{0}', space=sflag, size = 0x4, scoped, tag = 'scoped memory for waist_pred_net.1']
    %20 = vsyncpa [#allocation4], 0
    %21 = vsyncpa [#allocation6], 0
    %22 = vsyncpa [#allocation9], 0
    %23 = vsyncpa [#allocation12], 0
    %24 = vsyncpa [#allocation15], 0
    %25 = vsyncpa [#allocation18], 0
    // Predicated region
    $region2: #{waist_pred_net.1} parent=1 // pred_check
      _
    $region3: #{waist_pred_net.1} parent=1 // pred_check_branch
      %27 = sbr.rel (0) target = $region5
    $region4: #{waist_pred_net.1} parent=1 // pred_region
      %29 = vsyncadd [#allocation4], 0
      %s31 = sshll.u32 %s0, 4
      %s32 = int_to_ptr.hbm [resolvable:$true] %s31
      %s33 = sshll.u32 [#allocation3], 4
      %s34 = int_to_ptr.vmem [resolvable:$true] %s33
      %36 = dma.hbm_to_vmem [thread:$0]  %s32, 128, %s34, [#allocation4]
    $region5: #{waist_pred_net.1} parent=1 // pred_fallthru
      _
    // Predicated region
    $region6: #{waist_pred_net.1} parent=1 // pred_check
      _
    $region7: #{waist_pred_net.1} parent=1 // pred_check_branch
      %38 = sbr.rel (0) target = $region9
    $region8: #{waist_pred_net.1} parent=1 // pred_region
      %40 = vsyncadd [#allocation6], 0
      %s41 = sshll.u32 %s1, 4
      %s42 = int_to_ptr.hbm [resolvable:$true] %s41
      %s43 = sshll.u32 [#allocation5], 4
      %s44 = int_to_ptr.vmem [resolvable:$true] %s43
      %49 = dma.hbm_to_vmem [thread:$0]  %s42, 2048, %s44, [#allocation6], 256, 256, 16
    $region9: #{waist_pred_net.1} parent=1 // pred_fallthru
      _
    // Predicated region
    $region10: #{waist_pred_net.1} parent=1 // pred_check
      _
    $region11: #{waist_pred_net.1} parent=1 // pred_check_branch
      %51 = sbr.rel (0) target = $region13
    $region12: #{waist_pred_net.1} parent=1 // pred_region
      _
    $region13: #{waist_pred_net.1} parent=1 // pred_fallthru
      _
    // Predicated region
    $region14: #{waist_pred_net.1} parent=1 // pred_check
      _
    $region15: #{waist_pred_net.1} parent=1 // pred_check_branch
      %53 = sbr.rel (0) target = $region17
    $region16: #{waist_pred_net.1} parent=1 // pred_region
      %55 = vsyncadd [#allocation6], 0
      %s56 = sshll.u32 %s3, 4
      %s57 = int_to_ptr.hbm [resolvable:$true] %s56
      %s58 = sshll.u32 [#allocation7], 4
      %s59 = int_to_ptr.vmem [resolvable:$true] %s58
      %64 = dma.hbm_to_vmem [thread:$0]  %s57, 8192, %s59, [#allocation6], 128, 128, 8
    $region17: #{waist_pred_net.1} parent=1 // pred_fallthru
      _
    // Predicated region
    $region18: #{waist_pred_net.1} parent=1 // pred_check
      _
    $region19: #{waist_pred_net.1} parent=1 // pred_check_branch
      %66 = sbr.rel (0) target = $region21
    $region20: #{waist_pred_net.1} parent=1 // pred_region
      %68 = vsyncadd [#allocation9], 0
      %s70 = sshll.u32 %s4, 4
      %s71 = int_to_ptr.hbm [resolvable:$true] %s70
      %s72 = sshll.u32 [#allocation8], 4
      %s73 = int_to_ptr.vmem [resolvable:$true] %s72
      %75 = dma.hbm_to_vmem [thread:$0]  %s71, 32, %s73, [#allocation9]
    $region21: #{waist_pred_net.1} parent=1 // pred_fallthru
      _
    // Predicated region
    $region22: #{waist_pred_net.1} parent=1 // pred_check
      _
    $region23: #{waist_pred_net.1} parent=1 // pred_check_branch
      %77 = sbr.rel (0) target = $region25
    $region24: #{waist_pred_net.1} parent=1 // pred_region
      %79 = vsyncadd [#allocation9], 0
      %s80 = sshll.u32 %s5, 4
      %s81 = int_to_ptr.hbm [resolvable:$true] %s80
      %s82 = sshll.u32 [#allocation10], 4
      %s83 = int_to_ptr.vmem [resolvable:$true] %s82
      %88 = dma.hbm_to_vmem [thread:$0]  %s81, 2048, %s83, [#allocation9], 64, 64, 4
    $region25: #{waist_pred_net.1} parent=1 // pred_fallthru
      _
    // Predicated region
    $region26: #{waist_pred_net.1} parent=1 // pred_check
      _
    $region27: #{waist_pred_net.1} parent=1 // pred_check_branch
      %90 = sbr.rel (0) target = $region29
    $region28: #{waist_pred_net.1} parent=1 // pred_region
      _
    $region29: #{waist_pred_net.1} parent=1 // pred_fallthru
      _
    // Predicated region
    $region30: #{waist_pred_net.1} parent=1 // pred_check
      _
    $region31: #{waist_pred_net.1} parent=1 // pred_check_branch
      %92 = sbr.rel (0) target = $region33
    $region32: #{waist_pred_net.1} parent=1 // pred_region
      %94 = vsyncadd [#allocation12], 0
      %s95 = sshll.u32 %s7, 4
      %s96 = int_to_ptr.hbm [resolvable:$true] %s95
      %s97 = sshll.u32 [#allocation11], 4
      %s98 = int_to_ptr.vmem [resolvable:$true] %s97
      %103 = dma.hbm_to_vmem [thread:$0]  %s96, 1024, %s98, [#allocation12], 64, 64, 4
    $region33: #{waist_pred_net.1} parent=1 // pred_fallthru
      _
    // Predicated region
    $region34: #{waist_pred_net.1} parent=1 // pred_check
      _
    $region35: #{waist_pred_net.1} parent=1 // pred_check_branch
      %105 = sbr.rel (0) target = $region37
    $region36: #{waist_pred_net.1} parent=1 // pred_region
      %107 = vsyncadd [#allocation12], 0
      %s109 = sshll.u32 %s8, 4
      %s110 = int_to_ptr.hbm [resolvable:$true] %s109
      %s111 = sshll.u32 [#allocation13], 4
      %s112 = int_to_ptr.vmem [resolvable:$true] %s111
      %114 = dma.hbm_to_vmem [thread:$0]  %s110, 16, %s112, [#allocation12]
    $region37: #{waist_pred_net.1} parent=1 // pred_fallthru
      _
    // Predicated region
    $region38: #{waist_pred_net.1} parent=1 // pred_check
      _
    $region39: #{waist_pred_net.1} parent=1 // pred_check_branch
      %116 = sbr.rel (0) target = $region41
    $region40: #{waist_pred_net.1} parent=1 // pred_region
      %118 = vsyncadd [#allocation15], 0
      %s119 = sshll.u32 %s9, 4
      %s120 = int_to_ptr.hbm [resolvable:$true] %s119
      %s121 = sshll.u32 [#allocation14], 4
      %s122 = int_to_ptr.vmem [resolvable:$true] %s121
      %127 = dma.hbm_to_vmem [thread:$0]  %s120, 512, %s122, [#allocation15], 64, 64, 4
    $region41: #{waist_pred_net.1} parent=1 // pred_fallthru
      _
    // Predicated region
    $region42: #{waist_pred_net.1} parent=1 // pred_check
      _
    $region43: #{waist_pred_net.1} parent=1 // pred_check_branch
      %129 = sbr.rel (0) target = $region45
    $region44: #{waist_pred_net.1} parent=1 // pred_region
      %131 = vsyncadd [#allocation15], 0
      %s133 = sshll.u32 %s10, 4
      %s134 = int_to_ptr.hbm [resolvable:$true] %s133
      %s135 = sshll.u32 [#allocation16], 4
      %s136 = int_to_ptr.vmem [resolvable:$true] %s135
      %138 = dma.hbm_to_vmem [thread:$0]  %s134, 16, %s136, [#allocation15]
    $region45: #{waist_pred_net.1} parent=1 // pred_fallthru
      _
    // Predicated region
    $region46: #{waist_pred_net.1} parent=1 // pred_check
      _
    $region47: #{waist_pred_net.1} parent=1 // pred_check_branch
      %140 = sbr.rel (0) target = $region49
    $region48: #{waist_pred_net.1} parent=1 // pred_region
      %142 = vsyncadd [#allocation18], 0
      %s144 = sshll.u32 %s11, 4
      %s145 = int_to_ptr.hbm [resolvable:$true] %s144
      %s146 = sshll.u32 [#allocation17], 4
      %s147 = int_to_ptr.vmem [resolvable:$true] %s146
      %149 = dma.hbm_to_vmem [thread:$0]  %s145, 16, %s147, [#allocation18]
    $region49: #{waist_pred_net.1} parent=1 // pred_fallthru
      _
    // Predicated region
    $region50: #{waist_pred_net.1} parent=1 // pred_check
      _
    $region51: #{waist_pred_net.1} parent=1 // pred_check_branch
      %151 = sbr.rel (0) target = $region53
    $region52: #{waist_pred_net.1} parent=1 // pred_region
      _
    $region53: #{waist_pred_net.1} parent=1 // pred_fallthru
      _
    // Predicated region
    $region54: #{waist_pred_net.1} parent=1 // pred_check
      _
    $region55: #{waist_pred_net.1} parent=1 // pred_check_branch
      %153 = sbr.rel (0) target = $region57
    $region56: #{waist_pred_net.1} parent=1 // pred_region
      %155 = dma.done [#allocation4], 128
    $region57: #{waist_pred_net.1} parent=1 // pred_fallthru
      _
    // Predicated region
    $region58: #{waist_pred_net.1} parent=1 // pred_check
      _
    $region59: #{waist_pred_net.1} parent=1 // pred_check_branch
      %157 = sbr.rel (0) target = $region61
    $region60: #{waist_pred_net.1} parent=1 // pred_region
      %159 = dma.done [#allocation6], 2048
    $region61: #{waist_pred_net.1} parent=1 // pred_fallthru
      _
    // Predicated region
    $region62: #{waist_pred_net.1} parent=1 // pred_check
      _
    $region63: #{waist_pred_net.1} parent=1 // pred_check_branch
      %161 = sbr.rel (0) target = $region65
    $region64: #{waist_pred_net.1} parent=1 // pred_region
      %163 = dma.done [#allocation6], 8192
    $region65: #{waist_pred_net.1} parent=1 // pred_fallthru
      _
    // Predicated region
    $region66: #{waist_pred_net.1} parent=1 // pred_check
      _
    $region67: #{waist_pred_net.1} parent=1 // pred_check_branch
      %165 = sbr.rel (0) target = $region69
    $region68: #{waist_pred_net.1} parent=1 // pred_region
      %167 = dma.done [#allocation9], 32
    $region69: #{waist_pred_net.1} parent=1 // pred_fallthru
      _
    // Predicated region
    $region70: #{waist_pred_net.1} parent=1 // pred_check
      _
    $region71: #{waist_pred_net.1} parent=1 // pred_check_branch
      %169 = sbr.rel (0) target = $region73
    $region72: #{waist_pred_net.1} parent=1 // pred_region
      %171 = dma.done [#allocation9], 2048
    $region73: #{waist_pred_net.1} parent=1 // pred_fallthru
      _
    // Predicated region
    $region74: #{waist_pred_net.1} parent=1 // pred_check
      _
    $region75: #{waist_pred_net.1} parent=1 // pred_check_branch
      %173 = sbr.rel (0) target = $region77
    $region76: #{waist_pred_net.1} parent=1 // pred_region
      %175 = dma.done [#allocation12], 1024
    $region77: #{waist_pred_net.1} parent=1 // pred_fallthru
      _
    // Predicated region
    $region78: #{waist_pred_net.1} parent=1 // pred_check
      _
    $region79: #{waist_pred_net.1} parent=1 // pred_check_branch
      %177 = sbr.rel (0) target = $region81
    $region80: #{waist_pred_net.1} parent=1 // pred_region
      %179 = dma.done [#allocation12], 16
    $region81: #{waist_pred_net.1} parent=1 // pred_fallthru
      _
    // Predicated region
    $region82: #{waist_pred_net.1} parent=1 // pred_check
      _
    $region83: #{waist_pred_net.1} parent=1 // pred_check_branch
      %181 = sbr.rel (0) target = $region85
    $region84: #{waist_pred_net.1} parent=1 // pred_region
      %183 = dma.done [#allocation15], 512
    $region85: #{waist_pred_net.1} parent=1 // pred_fallthru
      _
    // Predicated region
    $region86: #{waist_pred_net.1} parent=1 // pred_check
      _
    $region87: #{waist_pred_net.1} parent=1 // pred_check_branch
      %185 = sbr.rel (0) target = $region89
    $region88: #{waist_pred_net.1} parent=1 // pred_region
      %187 = dma.done [#allocation15], 16
    $region89: #{waist_pred_net.1} parent=1 // pred_fallthru
      _
    // Predicated region
    $region90: #{waist_pred_net.1} parent=1 // pred_check
      _
    $region91: #{waist_pred_net.1} parent=1 // pred_check_branch
      %189 = sbr.rel (0) target = $region93
    $region92: #{waist_pred_net.1} parent=1 // pred_region
      %191 = dma.done [#allocation18], 16
    $region93: #{waist_pred_net.1} parent=1 // pred_fallthru
      _
    %v193 = vld [vmem:[#allocation3] sm:$0xff]
    %v194 = vpack.c.bf16 %v193, %v193
    %v195 = vld [vmem:[#allocation5] sm:$0xff]
    %v196 = vld [vmem:[#allocation5 + $0x8] sm:$0xff]
    %v197 = vld [vmem:[#allocation5 + $0x10] sm:$0xff]
    %v198 = vld [vmem:[#allocation5 + $0x18] sm:$0xff]
    %v199 = vld [vmem:[#allocation5 + $0x20] sm:$0xff]
    %v200 = vld [vmem:[#allocation5 + $0x28] sm:$0xff]
    %v201 = vld [vmem:[#allocation5 + $0x30] sm:$0xff]
    %v202 = vld [vmem:[#allocation5 + $0x38] sm:$0xff]
    %v203 = vld [vmem:[#allocation5 + $0x40] sm:$0xff]
    %v204 = vld [vmem:[#allocation5 + $0x48] sm:$0xff]
    %v205 = vld [vmem:[#allocation5 + $0x50] sm:$0xff]
    %v206 = vld [vmem:[#allocation5 + $0x58] sm:$0xff]
    %v207 = vld [vmem:[#allocation5 + $0x60] sm:$0xff]
    %v208 = vld [vmem:[#allocation5 + $0x68] sm:$0xff]
    %v209 = vld [vmem:[#allocation5 + $0x70] sm:$0xff]
    %v210 = vld [vmem:[#allocation5 + $0x78] sm:$0xff]
    %v211 = vld [vmem:[%s2] sm:$0xf]
    %v213 = vperm.slane %v211, 0
    %v214 = vperm.slane %v211, 1
    %v215 = vperm.slane %v211, 2
    %v216 = vperm.slane %v211, 3
    %v237 = vunpack.c.l.b16 %v195
    %v238 = vunpack.c.h.b16 %v195
    %v239 = vunpack.c.l.b16 %v196
    %v240 = vunpack.c.h.b16 %v196
    %v241 = vunpack.c.l.b16 %v197
    %v242 = vunpack.c.h.b16 %v197
    %v243 = vunpack.c.l.b16 %v198
    %v244 = vunpack.c.h.b16 %v198
    %v245 = vunpack.c.l.b16 %v199
    %v246 = vunpack.c.h.b16 %v199
    %v247 = vunpack.c.l.b16 %v200
    %v248 = vunpack.c.h.b16 %v200
    %v249 = vunpack.c.l.b16 %v201
    %v250 = vunpack.c.h.b16 %v201
    %v251 = vunpack.c.l.b16 %v202
    %v252 = vunpack.c.h.b16 %v202
    %v253 = vunpack.c.l.b16 %v203
    %v254 = vunpack.c.h.b16 %v203
    %v255 = vunpack.c.l.b16 %v204
    %v256 = vunpack.c.h.b16 %v204
    %v257 = vunpack.c.l.b16 %v205
    %v258 = vunpack.c.h.b16 %v205
    %v259 = vunpack.c.l.b16 %v206
    %v260 = vunpack.c.h.b16 %v206
    %v261 = vunpack.c.l.b16 %v207
    %v262 = vunpack.c.h.b16 %v207
    %v263 = vunpack.c.l.b16 %v208
    %v264 = vunpack.c.h.b16 %v208
    %v265 = vunpack.c.l.b16 %v209
    %v266 = vunpack.c.h.b16 %v209
    %v267 = vunpack.c.l.b16 %v210
    %v268 = vunpack.c.h.b16 %v210
    %v269 = vpack.c.b16 %v241, %v237
    %v270 = vpack.c.b16 %v242, %v238
    %v271 = vpack.c.b16 %v243, %v239
    %v272 = vpack.c.b16 %v244, %v240
    %v273 = vpack.c.b16 %v249, %v245
    %v274 = vpack.c.b16 %v250, %v246
    %v275 = vpack.c.b16 %v251, %v247
    %v276 = vpack.c.b16 %v252, %v248
    %v277 = vpack.c.b16 %v257, %v253
    %v278 = vpack.c.b16 %v258, %v254
    %v279 = vpack.c.b16 %v259, %v255
    %v280 = vpack.c.b16 %v260, %v256
    %v281 = vpack.c.b16 %v265, %v261
    %v282 = vpack.c.b16 %v266, %v262
    %v283 = vpack.c.b16 %v267, %v263
    %v284 = vpack.c.b16 %v268, %v264
    %vm301 = vcmask 523264
    %v303 = vsel %vm301, %v194, 0
    %305 = vmatpush.bf16.msra.mxu0 0
    %306 = vmatpush.bf16.msra.mxu0 0
    %307 = vmatpush.bf16.msra.mxu0 0
    %308 = vmatpush.bf16.msra.mxu0 0
    %309 = vmatpush.bf16.msra.mxu0 %v281
    %310 = vmatpush.bf16.msra.mxu0 %v277
    %311 = vmatpush.bf16.msra.mxu0 %v273
    %312 = vmatpush.bf16.msra.mxu0 %v269
    %313 = vmatmul.bf16.gmra.mxu0 %v303
    %v314 = vpop.f32.mrf.mxu0
    %v315 = vadd.f32 %v213, %v314
    %v316 = vpop.f32.mrf.mxu0
    %317 = vdwg.mxu0
    %318 = vmatpush.bf16.msra.mxu0 0
    %319 = vmatpush.bf16.msra.mxu0 0
    %320 = vmatpush.bf16.msra.mxu0 0
    %321 = vmatpush.bf16.msra.mxu0 0
    %322 = vmatpush.bf16.msra.mxu0 %v282
    %323 = vmatpush.bf16.msra.mxu0 %v278
    %324 = vmatpush.bf16.msra.mxu0 %v274
    %325 = vmatpush.bf16.msra.mxu0 %v270
    %326 = vmatmul.bf16.gmra.mxu0 %v303
    %v327 = vpop.f32.mrf.mxu0
    %v328 = vadd.f32 %v214, %v327
    %v329 = vpop.f32.mrf.mxu0
    %330 = vdwg.mxu0
    %331 = vmatpush.bf16.msra.mxu0 0
    %332 = vmatpush.bf16.msra.mxu0 0
    %333 = vmatpush.bf16.msra.mxu0 0
    %334 = vmatpush.bf16.msra.mxu0 0
    %335 = vmatpush.bf16.msra.mxu0 %v283
    %336 = vmatpush.bf16.msra.mxu0 %v279
    %337 = vmatpush.bf16.msra.mxu0 %v275
    %338 = vmatpush.bf16.msra.mxu0 %v271
    %339 = vmatmul.bf16.gmra.mxu0 %v303
    %v340 = vpop.f32.mrf.mxu0
    %v341 = vadd.f32 %v215, %v340
    %v342 = vpop.f32.mrf.mxu0
    %343 = vdwg.mxu0
    %344 = vmatpush.bf16.msra.mxu0 0
    %345 = vmatpush.bf16.msra.mxu0 0
    %346 = vmatpush.bf16.msra.mxu0 0
    %347 = vmatpush.bf16.msra.mxu0 0
    %348 = vmatpush.bf16.msra.mxu0 %v284
    %349 = vmatpush.bf16.msra.mxu0 %v280
    %350 = vmatpush.bf16.msra.mxu0 %v276
    %351 = vmatpush.bf16.msra.mxu0 %v272
    %352 = vmatmul.bf16.gmra.mxu0 %v303
    %v353 = vpop.f32.mrf.mxu0
    %v354 = vadd.f32 %v216, %v353
    %v355 = vpop.f32.mrf.mxu0
    %356 = vdwg.mxu0
    %v357 = vmul.f32 %v315, 0.2
    %v358 = vmul.f32 %v328, 0.2
    %v359 = vmul.f32 %v341, 0.2
    %v360 = vmul.f32 %v354, 0.2
    %v361 = vmax.f32 %v315, %v357
    %v362 = vmax.f32 %v328, %v358
    %v363 = vmax.f32 %v341, %v359
    %v364 = vmax.f32 %v354, %v360
    %v365 = vpack.c.bf16 %v361, %v361
    %v366 = vpack.c.bf16 %v362, %v362
    %v367 = vpack.c.bf16 %v363, %v363
    %v368 = vpack.c.bf16 %v364, %v364
    %v369 = vld [vmem:[#allocation7] sm:$0xff]
    %v370 = vld [vmem:[#allocation7 + $0x8] sm:$0xff]
    %v371 = vld [vmem:[#allocation7 + $0x10] sm:$0xff]
    %v372 = vld [vmem:[#allocation7 + $0x18] sm:$0xff]
    %v373 = vld [vmem:[#allocation7 + $0x20] sm:$0xff]
    %v374 = vld [vmem:[#allocation7 + $0x28] sm:$0xff]
    %v375 = vld [vmem:[#allocation7 + $0x30] sm:$0xff]
    %v376 = vld [vmem:[#allocation7 + $0x38] sm:$0xff]
    %v377 = vld [vmem:[#allocation7 + $0x40] sm:$0xff]
    %v378 = vld [vmem:[#allocation7 + $0x48] sm:$0xff]
    %v379 = vld [vmem:[#allocation7 + $0x50] sm:$0xff]
    %v380 = vld [vmem:[#allocation7 + $0x58] sm:$0xff]
    %v381 = vld [vmem:[#allocation7 + $0x60] sm:$0xff]
    %v382 = vld [vmem:[#allocation7 + $0x68] sm:$0xff]
    %v383 = vld [vmem:[#allocation7 + $0x70] sm:$0xff]
    %v384 = vld [vmem:[#allocation7 + $0x78] sm:$0xff]
    %v385 = vld [vmem:[#allocation7 + $0x80] sm:$0xff]
    %v386 = vld [vmem:[#allocation7 + $0x88] sm:$0xff]
    %v387 = vld [vmem:[#allocation7 + $0x90] sm:$0xff]
    %v388 = vld [vmem:[#allocation7 + $0x98] sm:$0xff]
    %v389 = vld [vmem:[#allocation7 + $0xa0] sm:$0xff]
    %v390 = vld [vmem:[#allocation7 + $0xa8] sm:$0xff]
    %v391 = vld [vmem:[#allocation7 + $0xb0] sm:$0xff]
    %v392 = vld [vmem:[#allocation7 + $0xb8] sm:$0xff]
    %v393 = vld [vmem:[#allocation7 + $0xc0] sm:$0xff]
    %v394 = vld [vmem:[#allocation7 + $0xc8] sm:$0xff]
    %v395 = vld [vmem:[#allocation7 + $0xd0] sm:$0xff]
    %v396 = vld [vmem:[#allocation7 + $0xd8] sm:$0xff]
    %v397 = vld [vmem:[#allocation7 + $0xe0] sm:$0xff]
    %v398 = vld [vmem:[#allocation7 + $0xe8] sm:$0xff]
    %v399 = vld [vmem:[#allocation7 + $0xf0] sm:$0xff]
    %v400 = vld [vmem:[#allocation7 + $0xf8] sm:$0xff]
    %v401 = vld [vmem:[#allocation7 + $0x100] sm:$0xff]
    %v402 = vld [vmem:[#allocation7 + $0x108] sm:$0xff]
    %v403 = vld [vmem:[#allocation7 + $0x110] sm:$0xff]
    %v404 = vld [vmem:[#allocation7 + $0x118] sm:$0xff]
    %v405 = vld [vmem:[#allocation7 + $0x120] sm:$0xff]
    %v406 = vld [vmem:[#allocation7 + $0x128] sm:$0xff]
    %v407 = vld [vmem:[#allocation7 + $0x130] sm:$0xff]
    %v408 = vld [vmem:[#allocation7 + $0x138] sm:$0xff]
    %v409 = vld [vmem:[#allocation7 + $0x140] sm:$0xff]
    %v410 = vld [vmem:[#allocation7 + $0x148] sm:$0xff]
    %v411 = vld [vmem:[#allocation7 + $0x150] sm:$0xff]
    %v412 = vld [vmem:[#allocation7 + $0x158] sm:$0xff]
    %v413 = vld [vmem:[#allocation7 + $0x160] sm:$0xff]
    %v414 = vld [vmem:[#allocation7 + $0x168] sm:$0xff]
    %v415 = vld [vmem:[#allocation7 + $0x170] sm:$0xff]
    %v416 = vld [vmem:[#allocation7 + $0x178] sm:$0xff]
    %v417 = vld [vmem:[#allocation7 + $0x180] sm:$0xff]
    %v418 = vld [vmem:[#allocation7 + $0x188] sm:$0xff]
    %v419 = vld [vmem:[#allocation7 + $0x190] sm:$0xff]
    %v420 = vld [vmem:[#allocation7 + $0x198] sm:$0xff]
    %v421 = vld [vmem:[#allocation7 + $0x1a0] sm:$0xff]
    %v422 = vld [vmem:[#allocation7 + $0x1a8] sm:$0xff]
    %v423 = vld [vmem:[#allocation7 + $0x1b0] sm:$0xff]
    %v424 = vld [vmem:[#allocation7 + $0x1b8] sm:$0xff]
    %v425 = vld [vmem:[#allocation7 + $0x1c0] sm:$0xff]
    %v426 = vld [vmem:[#allocation7 + $0x1c8] sm:$0xff]
    %v427 = vld [vmem:[#allocation7 + $0x1d0] sm:$0xff]
    %v428 = vld [vmem:[#allocation7 + $0x1d8] sm:$0xff]
    %v429 = vld [vmem:[#allocation7 + $0x1e0] sm:$0xff]
    %v430 = vld [vmem:[#allocation7 + $0x1e8] sm:$0xff]
    %v431 = vld [vmem:[#allocation7 + $0x1f0] sm:$0xff]
    %v432 = vld [vmem:[#allocation7 + $0x1f8] sm:$0xff]
    %v433 = vld [vmem:[#allocation8] sm:$0x3]
    %v435 = vperm.slane %v433, 0
    %v436 = vperm.slane %v433, 1
    %v503 = vunpack.c.l.b16 %v369
    %v504 = vunpack.c.h.b16 %v369
    %v505 = vunpack.c.l.b16 %v370
    %v506 = vunpack.c.h.b16 %v370
    %v507 = vunpack.c.l.b16 %v371
    %v508 = vunpack.c.h.b16 %v371
    %v509 = vunpack.c.l.b16 %v372
    %v510 = vunpack.c.h.b16 %v372
    %v511 = vunpack.c.l.b16 %v373
    %v512 = vunpack.c.h.b16 %v373
    %v513 = vunpack.c.l.b16 %v374
    %v514 = vunpack.c.h.b16 %v374
    %v515 = vunpack.c.l.b16 %v375
    %v516 = vunpack.c.h.b16 %v375
    %v517 = vunpack.c.l.b16 %v376
    %v518 = vunpack.c.h.b16 %v376
    %v519 = vunpack.c.l.b16 %v377
    %v520 = vunpack.c.h.b16 %v377
    %v521 = vunpack.c.l.b16 %v378
    %v522 = vunpack.c.h.b16 %v378
    %v523 = vunpack.c.l.b16 %v379
    %v524 = vunpack.c.h.b16 %v379
    %v525 = vunpack.c.l.b16 %v380
    %v526 = vunpack.c.h.b16 %v380
    %v527 = vunpack.c.l.b16 %v381
    %v528 = vunpack.c.h.b16 %v381
    %v529 = vunpack.c.l.b16 %v382
    %v530 = vunpack.c.h.b16 %v382
    %v531 = vunpack.c.l.b16 %v383
    %v532 = vunpack.c.h.b16 %v383
    %v533 = vunpack.c.l.b16 %v384
    %v534 = vunpack.c.h.b16 %v384
    %v535 = vunpack.c.l.b16 %v385
    %v536 = vunpack.c.h.b16 %v385
    %v537 = vunpack.c.l.b16 %v386
    %v538 = vunpack.c.h.b16 %v386
    %v539 = vunpack.c.l.b16 %v387
    %v540 = vunpack.c.h.b16 %v387
    %v541 = vunpack.c.l.b16 %v388
    %v542 = vunpack.c.h.b16 %v388
    %v543 = vunpack.c.l.b16 %v389
    %v544 = vunpack.c.h.b16 %v389
    %v545 = vunpack.c.l.b16 %v390
    %v546 = vunpack.c.h.b16 %v390
    %v547 = vunpack.c.l.b16 %v391
    %v548 = vunpack.c.h.b16 %v391
    %v549 = vunpack.c.l.b16 %v392
    %v550 = vunpack.c.h.b16 %v392
    %v551 = vunpack.c.l.b16 %v393
    %v552 = vunpack.c.h.b16 %v393
    %v553 = vunpack.c.l.b16 %v394
    %v554 = vunpack.c.h.b16 %v394
    %v555 = vunpack.c.l.b16 %v395
    %v556 = vunpack.c.h.b16 %v395
    %v557 = vunpack.c.l.b16 %v396
    %v558 = vunpack.c.h.b16 %v396
    %v559 = vunpack.c.l.b16 %v397
    %v560 = vunpack.c.h.b16 %v397
    %v561 = vunpack.c.l.b16 %v398
    %v562 = vunpack.c.h.b16 %v398
    %v563 = vunpack.c.l.b16 %v399
    %v564 = vunpack.c.h.b16 %v399
    %v565 = vunpack.c.l.b16 %v400
    %v566 = vunpack.c.h.b16 %v400
    %v567 = vunpack.c.l.b16 %v401
    %v568 = vunpack.c.h.b16 %v401
    %v569 = vunpack.c.l.b16 %v402
    %v570 = vunpack.c.h.b16 %v402
    %v571 = vunpack.c.l.b16 %v403
    %v572 = vunpack.c.h.b16 %v403
    %v573 = vunpack.c.l.b16 %v404
    %v574 = vunpack.c.h.b16 %v404
    %v575 = vunpack.c.l.b16 %v405
    %v576 = vunpack.c.h.b16 %v405
    %v577 = vunpack.c.l.b16 %v406
    %v578 = vunpack.c.h.b16 %v406
    %v579 = vunpack.c.l.b16 %v407
    %v580 = vunpack.c.h.b16 %v407
    %v581 = vunpack.c.l.b16 %v408
    %v582 = vunpack.c.h.b16 %v408
    %v583 = vunpack.c.l.b16 %v409
    %v584 = vunpack.c.h.b16 %v409
    %v585 = vunpack.c.l.b16 %v410
    %v586 = vunpack.c.h.b16 %v410
    %v587 = vunpack.c.l.b16 %v411
    %v588 = vunpack.c.h.b16 %v411
    %v589 = vunpack.c.l.b16 %v412
    %v590 = vunpack.c.h.b16 %v412
    %v591 = vunpack.c.l.b16 %v413
    %v592 = vunpack.c.h.b16 %v413
    %v593 = vunpack.c.l.b16 %v414
    %v594 = vunpack.c.h.b16 %v414
    %v595 = vunpack.c.l.b16 %v415
    %v596 = vunpack.c.h.b16 %v415
    %v597 = vunpack.c.l.b16 %v416
    %v598 = vunpack.c.h.b16 %v416
    %v599 = vunpack.c.l.b16 %v417
    %v600 = vunpack.c.h.b16 %v417
    %v601 = vunpack.c.l.b16 %v418
    %v602 = vunpack.c.h.b16 %v418
    %v603 = vunpack.c.l.b16 %v419
    %v604 = vunpack.c.h.b16 %v419
    %v605 = vunpack.c.l.b16 %v420
    %v606 = vunpack.c.h.b16 %v420
    %v607 = vunpack.c.l.b16 %v421
    %v608 = vunpack.c.h.b16 %v421
    %v609 = vunpack.c.l.b16 %v422
    %v610 = vunpack.c.h.b16 %v422
    %v611 = vunpack.c.l.b16 %v423
    %v612 = vunpack.c.h.b16 %v423
    %v613 = vunpack.c.l.b16 %v424
    %v614 = vunpack.c.h.b16 %v424
    %v615 = vunpack.c.l.b16 %v425
    %v616 = vunpack.c.h.b16 %v425
    %v617 = vunpack.c.l.b16 %v426
    %v618 = vunpack.c.h.b16 %v426
    %v619 = vunpack.c.l.b16 %v427
    %v620 = vunpack.c.h.b16 %v427
    %v621 = vunpack.c.l.b16 %v428
    %v622 = vunpack.c.h.b16 %v428
    %v623 = vunpack.c.l.b16 %v429
    %v624 = vunpack.c.h.b16 %v429
    %v625 = vunpack.c.l.b16 %v430
    %v626 = vunpack.c.h.b16 %v430
    %v627 = vunpack.c.l.b16 %v431
    %v628 = vunpack.c.h.b16 %v431
    %v629 = vunpack.c.l.b16 %v432
    %v630 = vunpack.c.h.b16 %v432
    %v631 = vpack.c.b16 %v505, %v503
    %v632 = vpack.c.b16 %v506, %v504
    %v633 = vpack.c.b16 %v509, %v507
    %v634 = vpack.c.b16 %v510, %v508
    %v635 = vpack.c.b16 %v513, %v511
    %v636 = vpack.c.b16 %v514, %v512
    %v637 = vpack.c.b16 %v517, %v515
    %v638 = vpack.c.b16 %v518, %v516
    %v639 = vpack.c.b16 %v521, %v519
    %v640 = vpack.c.b16 %v522, %v520
    %v641 = vpack.c.b16 %v525, %v523
    %v642 = vpack.c.b16 %v526, %v524
    %v643 = vpack.c.b16 %v529, %v527
    %v644 = vpack.c.b16 %v530, %v528
    %v645 = vpack.c.b16 %v533, %v531
    %v646 = vpack.c.b16 %v534, %v532
    %v647 = vpack.c.b16 %v537, %v535
    %v648 = vpack.c.b16 %v538, %v536
    %v649 = vpack.c.b16 %v541, %v539
    %v650 = vpack.c.b16 %v542, %v540
    %v651 = vpack.c.b16 %v545, %v543
    %v652 = vpack.c.b16 %v546, %v544
    %v653 = vpack.c.b16 %v549, %v547
    %v654 = vpack.c.b16 %v550, %v548
    %v655 = vpack.c.b16 %v553, %v551
    %v656 = vpack.c.b16 %v554, %v552
    %v657 = vpack.c.b16 %v557, %v555
    %v658 = vpack.c.b16 %v558, %v556
    %v659 = vpack.c.b16 %v561, %v559
    %v660 = vpack.c.b16 %v562, %v560
    %v661 = vpack.c.b16 %v565, %v563
    %v662 = vpack.c.b16 %v566, %v564
    %v663 = vpack.c.b16 %v569, %v567
    %v664 = vpack.c.b16 %v570, %v568
    %v665 = vpack.c.b16 %v573, %v571
    %v666 = vpack.c.b16 %v574, %v572
    %v667 = vpack.c.b16 %v577, %v575
    %v668 = vpack.c.b16 %v578, %v576
    %v669 = vpack.c.b16 %v581, %v579
    %v670 = vpack.c.b16 %v582, %v580
    %v671 = vpack.c.b16 %v585, %v583
    %v672 = vpack.c.b16 %v586, %v584
    %v673 = vpack.c.b16 %v589, %v587
    %v674 = vpack.c.b16 %v590, %v588
    %v675 = vpack.c.b16 %v593, %v591
    %v676 = vpack.c.b16 %v594, %v592
    %v677 = vpack.c.b16 %v597, %v595
    %v678 = vpack.c.b16 %v598, %v596
    %v679 = vpack.c.b16 %v601, %v599
    %v680 = vpack.c.b16 %v602, %v600
    %v681 = vpack.c.b16 %v605, %v603
    %v682 = vpack.c.b16 %v606, %v604
    %v683 = vpack.c.b16 %v609, %v607
    %v684 = vpack.c.b16 %v610, %v608
    %v685 = vpack.c.b16 %v613, %v611
    %v686 = vpack.c.b16 %v614, %v612
    %v687 = vpack.c.b16 %v617, %v615
    %v688 = vpack.c.b16 %v618, %v616
    %v689 = vpack.c.b16 %v621, %v619
    %v690 = vpack.c.b16 %v622, %v620
    %v691 = vpack.c.b16 %v625, %v623
    %v692 = vpack.c.b16 %v626, %v624
    %v693 = vpack.c.b16 %v629, %v627
    %v694 = vpack.c.b16 %v630, %v628
    %759 = vmatpush.bf16.msra.mxu0 %v645
    %760 = vmatpush.bf16.msra.mxu0 %v643
    %761 = vmatpush.bf16.msra.mxu0 %v641
    %762 = vmatpush.bf16.msra.mxu0 %v639
    %763 = vmatpush.bf16.msra.mxu0 %v637
    %764 = vmatpush.bf16.msra.mxu0 %v635
    %765 = vmatpush.bf16.msra.mxu0 %v633
    %766 = vmatpush.bf16.msra.mxu0 %v631
    %767 = vmatmul.bf16.gmra.mxu0 %v365
    %v768 = vpop.f32.mrf.mxu0
    %v769 = vadd.f32 %v435, %v768
    %v770 = vpop.f32.mrf.mxu0
    %771 = vdwg.mxu0
    %772 = vmatpush.bf16.msra.mxu0 %v661
    %773 = vmatpush.bf16.msra.mxu0 %v659
    %774 = vmatpush.bf16.msra.mxu0 %v657
    %775 = vmatpush.bf16.msra.mxu0 %v655
    %776 = vmatpush.bf16.msra.mxu0 %v653
    %777 = vmatpush.bf16.msra.mxu0 %v651
    %778 = vmatpush.bf16.msra.mxu0 %v649
    %779 = vmatpush.bf16.msra.mxu0 %v647
    %780 = vmatmul.bf16.gmra.mxu0 %v366
    %v781 = vpop.f32.mrf.mxu0
    %v782 = vadd.f32 %v769, %v781
    %v783 = vpop.f32.mrf.mxu0
    %784 = vdwg.mxu0
    %785 = vmatpush.bf16.msra.mxu0 %v677
    %786 = vmatpush.bf16.msra.mxu0 %v675
    %787 = vmatpush.bf16.msra.mxu0 %v673
    %788 = vmatpush.bf16.msra.mxu0 %v671
    %789 = vmatpush.bf16.msra.mxu0 %v669
    %790 = vmatpush.bf16.msra.mxu0 %v667
    %791 = vmatpush.bf16.msra.mxu0 %v665
    %792 = vmatpush.bf16.msra.mxu0 %v663
    %793 = vmatmul.bf16.gmra.mxu0 %v367
    %v794 = vpop.f32.mrf.mxu0
    %v795 = vadd.f32 %v782, %v794
    %v796 = vpop.f32.mrf.mxu0
    %797 = vdwg.mxu0
    %798 = vmatpush.bf16.msra.mxu0 %v693
    %799 = vmatpush.bf16.msra.mxu0 %v691
    %800 = vmatpush.bf16.msra.mxu0 %v689
    %801 = vmatpush.bf16.msra.mxu0 %v687
    %802 = vmatpush.bf16.msra.mxu0 %v685
    %803 = vmatpush.bf16.msra.mxu0 %v683
    %804 = vmatpush.bf16.msra.mxu0 %v681
    %805 = vmatpush.bf16.msra.mxu0 %v679
    %806 = vmatmul.bf16.gmra.mxu0 %v368
    %v807 = vpop.f32.mrf.mxu0
    %v808 = vadd.f32 %v795, %v807
    %v809 = vpop.f32.mrf.mxu0
    %810 = vdwg.mxu0
    %811 = vmatpush.bf16.msra.mxu0 %v646
    %812 = vmatpush.bf16.msra.mxu0 %v644
    %813 = vmatpush.bf16.msra.mxu0 %v642
    %814 = vmatpush.bf16.msra.mxu0 %v640
    %815 = vmatpush.bf16.msra.mxu0 %v638
    %816 = vmatpush.bf16.msra.mxu0 %v636
    %817 = vmatpush.bf16.msra.mxu0 %v634
    %818 = vmatpush.bf16.msra.mxu0 %v632
    %819 = vmatmul.bf16.gmra.mxu0 %v365
    %v820 = vpop.f32.mrf.mxu0
    %v821 = vadd.f32 %v436, %v820
    %v822 = vpop.f32.mrf.mxu0
    %823 = vdwg.mxu0
    %824 = vmatpush.bf16.msra.mxu0 %v662
    %825 = vmatpush.bf16.msra.mxu0 %v660
    %826 = vmatpush.bf16.msra.mxu0 %v658
    %827 = vmatpush.bf16.msra.mxu0 %v656
    %828 = vmatpush.bf16.msra.mxu0 %v654
    %829 = vmatpush.bf16.msra.mxu0 %v652
    %830 = vmatpush.bf16.msra.mxu0 %v650
    %831 = vmatpush.bf16.msra.mxu0 %v648
    %832 = vmatmul.bf16.gmra.mxu0 %v366
    %v833 = vpop.f32.mrf.mxu0
    %v834 = vadd.f32 %v821, %v833
    %v835 = vpop.f32.mrf.mxu0
    %836 = vdwg.mxu0
    %837 = vmatpush.bf16.msra.mxu0 %v678
    %838 = vmatpush.bf16.msra.mxu0 %v676
    %839 = vmatpush.bf16.msra.mxu0 %v674
    %840 = vmatpush.bf16.msra.mxu0 %v672
    %841 = vmatpush.bf16.msra.mxu0 %v670
    %842 = vmatpush.bf16.msra.mxu0 %v668
    %843 = vmatpush.bf16.msra.mxu0 %v666
    %844 = vmatpush.bf16.msra.mxu0 %v664
    %845 = vmatmul.bf16.gmra.mxu0 %v367
    %v846 = vpop.f32.mrf.mxu0
    %v847 = vadd.f32 %v834, %v846
    %v848 = vpop.f32.mrf.mxu0
    %849 = vdwg.mxu0
    %850 = vmatpush.bf16.msra.mxu0 %v694
    %851 = vmatpush.bf16.msra.mxu0 %v692
    %852 = vmatpush.bf16.msra.mxu0 %v690
    %853 = vmatpush.bf16.msra.mxu0 %v688
    %854 = vmatpush.bf16.msra.mxu0 %v686
    %855 = vmatpush.bf16.msra.mxu0 %v684
    %856 = vmatpush.bf16.msra.mxu0 %v682
    %857 = vmatpush.bf16.msra.mxu0 %v680
    %858 = vmatmul.bf16.gmra.mxu0 %v368
    %v859 = vpop.f32.mrf.mxu0
    %v860 = vadd.f32 %v847, %v859
    %v861 = vpop.f32.mrf.mxu0
    %862 = vdwg.mxu0
    %v863 = vmul.f32 %v808, 0.2
    %v864 = vmul.f32 %v860, 0.2
    %v865 = vmax.f32 %v808, %v863
    %v866 = vmax.f32 %v860, %v864
    %v867 = vpack.c.bf16 %v865, %v865
    %v868 = vpack.c.bf16 %v866, %v866
    %v869 = vld [vmem:[#allocation10] sm:$0xf]
    %v870 = vld [vmem:[#allocation10 + $0x4] sm:$0xf]
    %v871 = vld [vmem:[#allocation10 + $0x8] sm:$0xf]
    %v872 = vld [vmem:[#allocation10 + $0xc] sm:$0xf]
    %v873 = vld [vmem:[#allocation10 + $0x10] sm:$0xf]
    %v874 = vld [vmem:[#allocation10 + $0x14] sm:$0xf]
    %v875 = vld [vmem:[#allocation10 + $0x18] sm:$0xf]
    %v876 = vld [vmem:[#allocation10 + $0x1c] sm:$0xf]
    %v877 = vld [vmem:[#allocation10 + $0x20] sm:$0xf]
    %v878 = vld [vmem:[#allocation10 + $0x24] sm:$0xf]
    %v879 = vld [vmem:[#allocation10 + $0x28] sm:$0xf]
    %v880 = vld [vmem:[#allocation10 + $0x2c] sm:$0xf]
    %v881 = vld [vmem:[#allocation10 + $0x30] sm:$0xf]
    %v882 = vld [vmem:[#allocation10 + $0x34] sm:$0xf]
    %v883 = vld [vmem:[#allocation10 + $0x38] sm:$0xf]
    %v884 = vld [vmem:[#allocation10 + $0x3c] sm:$0xf]
    %v885 = vld [vmem:[#allocation10 + $0x40] sm:$0xf]
    %v886 = vld [vmem:[#allocation10 + $0x44] sm:$0xf]
    %v887 = vld [vmem:[#allocation10 + $0x48] sm:$0xf]
    %v888 = vld [vmem:[#allocation10 + $0x4c] sm:$0xf]
    %v889 = vld [vmem:[#allocation10 + $0x50] sm:$0xf]
    %v890 = vld [vmem:[#allocation10 + $0x54] sm:$0xf]
    %v891 = vld [vmem:[#allocation10 + $0x58] sm:$0xf]
    %v892 = vld [vmem:[#allocation10 + $0x5c] sm:$0xf]
    %v893 = vld [vmem:[#allocation10 + $0x60] sm:$0xf]
    %v894 = vld [vmem:[#allocation10 + $0x64] sm:$0xf]
    %v895 = vld [vmem:[#allocation10 + $0x68] sm:$0xf]
    %v896 = vld [vmem:[#allocation10 + $0x6c] sm:$0xf]
    %v897 = vld [vmem:[#allocation10 + $0x70] sm:$0xf]
    %v898 = vld [vmem:[#allocation10 + $0x74] sm:$0xf]
    %v899 = vld [vmem:[#allocation10 + $0x78] sm:$0xf]
    %v900 = vld [vmem:[#allocation10 + $0x7c] sm:$0xf]
    %v901 = vld [vmem:[%s6] sm:$0x1]
    %v903 = vperm.slane %v901, 0
    %v937 = vunpack.c.l.b16 %v869
    %v938 = vunpack.c.l.b16 %v870
    %v939 = vunpack.c.l.b16 %v871
    %v940 = vunpack.c.l.b16 %v872
    %v941 = vunpack.c.l.b16 %v873
    %v942 = vunpack.c.l.b16 %v874
    %v943 = vunpack.c.l.b16 %v875
    %v944 = vunpack.c.l.b16 %v876
    %v945 = vunpack.c.l.b16 %v877
    %v946 = vunpack.c.l.b16 %v878
    %v947 = vunpack.c.l.b16 %v879
    %v948 = vunpack.c.l.b16 %v880
    %v949 = vunpack.c.l.b16 %v881
    %v950 = vunpack.c.l.b16 %v882
    %v951 = vunpack.c.l.b16 %v883
    %v952 = vunpack.c.l.b16 %v884
    %v953 = vunpack.c.l.b16 %v885
    %v954 = vunpack.c.l.b16 %v886
    %v955 = vunpack.c.l.b16 %v887
    %v956 = vunpack.c.l.b16 %v888
    %v957 = vunpack.c.l.b16 %v889
    %v958 = vunpack.c.l.b16 %v890
    %v959 = vunpack.c.l.b16 %v891
    %v960 = vunpack.c.l.b16 %v892
    %v961 = vunpack.c.l.b16 %v893
    %v962 = vunpack.c.l.b16 %v894
    %v963 = vunpack.c.l.b16 %v895
    %v964 = vunpack.c.l.b16 %v896
    %v965 = vunpack.c.l.b16 %v897
    %v966 = vunpack.c.l.b16 %v898
    %v967 = vunpack.c.l.b16 %v899
    %v968 = vunpack.c.l.b16 %v900
    %v969 = vpack.c.b16 %v938, %v937
    %v970 = vpack.c.b16 %v940, %v939
    %v971 = vpack.c.b16 %v942, %v941
    %v972 = vpack.c.b16 %v944, %v943
    %v973 = vpack.c.b16 %v946, %v945
    %v974 = vpack.c.b16 %v948, %v947
    %v975 = vpack.c.b16 %v950, %v949
    %v976 = vpack.c.b16 %v952, %v951
    %v977 = vpack.c.b16 %v954, %v953
    %v978 = vpack.c.b16 %v956, %v955
    %v979 = vpack.c.b16 %v958, %v957
    %v980 = vpack.c.b16 %v960, %v959
    %v981 = vpack.c.b16 %v962, %v961
    %v982 = vpack.c.b16 %v964, %v963
    %v983 = vpack.c.b16 %v966, %v965
    %v984 = vpack.c.b16 %v968, %v967
    %1001 = vmatpush.bf16.msra.mxu0 %v976
    %1002 = vmatpush.bf16.msra.mxu0 %v975
    %1003 = vmatpush.bf16.msra.mxu0 %v974
    %1004 = vmatpush.bf16.msra.mxu0 %v973
    %1005 = vmatpush.bf16.msra.mxu0 %v972
    %1006 = vmatpush.bf16.msra.mxu0 %v971
    %1007 = vmatpush.bf16.msra.mxu0 %v970
    %1008 = vmatpush.bf16.msra.mxu0 %v969
    %1009 = vmatmul.bf16.gmra.mxu0 %v867
    %v1010 = vpop.f32.mrf.mxu0
    %v1011 = vadd.f32 %v903, %v1010
    %v1012 = vpop.f32.mrf.mxu0
    %1013 = vdwg.mxu0
    %1014 = vmatpush.bf16.msra.mxu0 %v984
    %1015 = vmatpush.bf16.msra.mxu0 %v983
    %1016 = vmatpush.bf16.msra.mxu0 %v982
    %1017 = vmatpush.bf16.msra.mxu0 %v981
    %1018 = vmatpush.bf16.msra.mxu0 %v980
    %1019 = vmatpush.bf16.msra.mxu0 %v979
    %1020 = vmatpush.bf16.msra.mxu0 %v978
    %1021 = vmatpush.bf16.msra.mxu0 %v977
    %1022 = vmatmul.bf16.gmra.mxu0 %v868
    %v1023 = vpop.f32.mrf.mxu0
    %v1024 = vadd.f32 %v1011, %v1023
    %v1025 = vpop.f32.mrf.mxu0
    %1026 = vdwg.mxu0
    %v1027 = vmul.f32 %v1024, 0.2
    %v1028 = vmax.f32 %v1024, %v1027
    %v1029 = vpack.c.bf16 %v1028, %v1028
    %v1030 = vld [vmem:[#allocation11] sm:$0xf]
    %v1031 = vld [vmem:[#allocation11 + $0x4] sm:$0xf]
    %v1032 = vld [vmem:[#allocation11 + $0x8] sm:$0xf]
    %v1033 = vld [vmem:[#allocation11 + $0xc] sm:$0xf]
    %v1034 = vld [vmem:[#allocation11 + $0x10] sm:$0xf]
    %v1035 = vld [vmem:[#allocation11 + $0x14] sm:$0xf]
    %v1036 = vld [vmem:[#allocation11 + $0x18] sm:$0xf]
    %v1037 = vld [vmem:[#allocation11 + $0x1c] sm:$0xf]
    %v1038 = vld [vmem:[#allocation11 + $0x20] sm:$0xf]
    %v1039 = vld [vmem:[#allocation11 + $0x24] sm:$0xf]
    %v1040 = vld [vmem:[#allocation11 + $0x28] sm:$0xf]
    %v1041 = vld [vmem:[#allocation11 + $0x2c] sm:$0xf]
    %v1042 = vld [vmem:[#allocation11 + $0x30] sm:$0xf]
    %v1043 = vld [vmem:[#allocation11 + $0x34] sm:$0xf]
    %v1044 = vld [vmem:[#allocation11 + $0x38] sm:$0xf]
    %v1045 = vld [vmem:[#allocation11 + $0x3c] sm:$0xf]
    %v1046 = vld [vmem:[#allocation13] sm:$0x1]
    %v1048 = vperm.slane %v1046, 0
    %v1066 = vunpack.c.l.b16 %v1030
    %v1067 = vunpack.c.l.b16 %v1031
    %v1068 = vunpack.c.l.b16 %v1032
    %v1069 = vunpack.c.l.b16 %v1033
    %v1070 = vunpack.c.l.b16 %v1034
    %v1071 = vunpack.c.l.b16 %v1035
    %v1072 = vunpack.c.l.b16 %v1036
    %v1073 = vunpack.c.l.b16 %v1037
    %v1074 = vunpack.c.l.b16 %v1038
    %v1075 = vunpack.c.l.b16 %v1039
    %v1076 = vunpack.c.l.b16 %v1040
    %v1077 = vunpack.c.l.b16 %v1041
    %v1078 = vunpack.c.l.b16 %v1042
    %v1079 = vunpack.c.l.b16 %v1043
    %v1080 = vunpack.c.l.b16 %v1044
    %v1081 = vunpack.c.l.b16 %v1045
    %v1082 = vpack.c.b16 %v1067, %v1066
    %v1083 = vpack.c.b16 %v1069, %v1068
    %v1084 = vpack.c.b16 %v1071, %v1070
    %v1085 = vpack.c.b16 %v1073, %v1072
    %v1086 = vpack.c.b16 %v1075, %v1074
    %v1087 = vpack.c.b16 %v1077, %v1076
    %v1088 = vpack.c.b16 %v1079, %v1078
    %v1089 = vpack.c.b16 %v1081, %v1080
    %1098 = vmatpush.bf16.msra.mxu0 %v1089
    %1099 = vmatpush.bf16.msra.mxu0 %v1088
    %1100 = vmatpush.bf16.msra.mxu0 %v1087
    %1101 = vmatpush.bf16.msra.mxu0 %v1086
    %1102 = vmatpush.bf16.msra.mxu0 %v1085
    %1103 = vmatpush.bf16.msra.mxu0 %v1084
    %1104 = vmatpush.bf16.msra.mxu0 %v1083
    %1105 = vmatpush.bf16.msra.mxu0 %v1082
    %1106 = vmatmul.bf16.gmra.mxu0 %v1029
    %v1107 = vpop.f32.mrf.mxu0
    %v1108 = vadd.f32 %v1048, %v1107
    %v1109 = vpop.f32.mrf.mxu0
    %1110 = vdwg.mxu0
    %v1111 = vmul.f32 %v1108, 0.2
    %v1112 = vmax.f32 %v1108, %v1111
    %v1113 = vpack.c.bf16 %v1112, %v1112
    %v1114 = vld [vmem:[#allocation14] sm:$0xf]
    %v1115 = vld [vmem:[#allocation14 + $0x4] sm:$0xf]
    %v1116 = vld [vmem:[#allocation14 + $0x8] sm:$0xf]
    %v1117 = vld [vmem:[#allocation14 + $0xc] sm:$0xf]
    %v1118 = vld [vmem:[#allocation14 + $0x10] sm:$0xf]
    %v1119 = vld [vmem:[#allocation14 + $0x14] sm:$0xf]
    %v1120 = vld [vmem:[#allocation14 + $0x18] sm:$0xf]
    %v1121 = vld [vmem:[#allocation14 + $0x1c] sm:$0xf]
    %v1122 = vld [vmem:[#allocation16] sm:$0x1]
    %v1124 = vperm.slane %v1122, 0
    %v1134 = vunpack.c.l.b16 %v1114
    %v1135 = vunpack.c.l.b16 %v1115
    %v1136 = vunpack.c.l.b16 %v1116
    %v1137 = vunpack.c.l.b16 %v1117
    %v1138 = vunpack.c.l.b16 %v1118
    %v1139 = vunpack.c.l.b16 %v1119
    %v1140 = vunpack.c.l.b16 %v1120
    %v1141 = vunpack.c.l.b16 %v1121
    %v1142 = vpack.c.b16 %v1135, %v1134
    %v1143 = vpack.c.b16 %v1137, %v1136
    %v1144 = vpack.c.b16 %v1139, %v1138
    %v1145 = vpack.c.b16 %v1141, %v1140
    %v1151 = vsel %vm301, %v1113, 0
    %1153 = vmatpush.bf16.msra.mxu0 0
    %1154 = vmatpush.bf16.msra.mxu0 0
    %1155 = vmatpush.bf16.msra.mxu0 0
    %1156 = vmatpush.bf16.msra.mxu0 0
    %1157 = vmatpush.bf16.msra.mxu0 %v1145
    %1158 = vmatpush.bf16.msra.mxu0 %v1144
    %1159 = vmatpush.bf16.msra.mxu0 %v1143
    %1160 = vmatpush.bf16.msra.mxu0 %v1142
    %1161 = vmatmul.bf16.gmra.mxu0 %v1151
    %v1162 = vpop.f32.mrf.mxu0
    %v1163 = vadd.f32 %v1124, %v1162
    %v1164 = vpop.f32.mrf.mxu0
    %1165 = vdwg.mxu0
    %v1166 = vmul.f32 %v1163, 0.2
    %v1167 = vmax.f32 %v1163, %v1166
    %v1168 = vld [vmem:[#allocation17] sm:$0x1]
    %v1170 = vperm.slane %v1168, 0
    %v1172 = vmul.f32 %v1167, %v1170
    %vm1173 = vcmask 261120
    %v1174 = vsel %vm1173, %v1172, 0.0
    %1175 = vadd.xlane.f32.xlu0 %v1174
    %v1176 = vpop.xlane.xlu0 %1175
    %v1177 = vld [vmem:[#allocation2] sm:$0x1]
    %v1179 = vperm.slane %v1177, 0
    %v1181 = vadd.f32 %v1176, %v1179
    %vm1182 = vcmask 7168
    %1183 = vst.msk [vmem:[%s13] sm:$0xff] %vm1182, %v1181
    // Predicated region
    $region94: #{waist_pred_net.1} parent=1 // pred_check
      _
    $region95: #{waist_pred_net.1} parent=1 // pred_check_branch
      %1185 = sbr.rel (0) target = $region97
    $region96: #{waist_pred_net.1} parent=1 // pred_region
      _
    $region97: #{waist_pred_net.1} parent=1 // pred_fallthru
      _
    // Predicated region
    $region98: #{waist_pred_net.1} parent=1 // pred_check
      _
    $region99: #{waist_pred_net.1} parent=1 // pred_check_branch
      %1187 = sbr.rel (0) target = $region101
    $region100: #{waist_pred_net.1} parent=1 // pred_region
      _
    $region101: #{waist_pred_net.1} parent=1 // pred_fallthru
      _
    %1188 = vsyncpa [#allocation4], 1
    %1189 = vsyncpa [#allocation6], 1
    %1190 = vsyncpa [#allocation9], 1
    %1191 = vsyncpa [#allocation12], 1
    %1192 = vsyncpa [#allocation15], 1
    %1193 = vsyncpa [#allocation18], 1

</llo_original>
